<compile_context>
chip_gen: v7x
topology: tpu7x:2x2x1
jax: 0.10.0
libtpu: 0.0.40
codegen_flags: <defaults>
</compile_context>

<pallas_src>
from functools import partial
import math

import jax
import jax.numpy as jnp
from jax import lax
from jax.experimental import pallas as pl
from jax.experimental.pallas import tpu as pltpu

KSIZE = 4
NEG_SLOPE = 0.2
BN_EPS = 1e-5
LANE = 128
TILE_BUDGET = 4 * 1024 * 1024        # per-step compute working-set target
VMEM_LIMIT = 64 * 1024 * 1024        # scoped VMEM cap (usage stays far below this)


def _round_up(x, m):
    return (x + m - 1) // m * m


def _pad_channels(x, cp):
    c = x.shape[-1]
    if c == cp:
        return x
    return jnp.pad(x, ((0, 0), (0, 0), (0, 0), (0, cp - c)))


def _pick_row_tile(ho, wo, wp_e, c_eff, k_eff, cout_pad):
    """Largest divisor of Ho whose per-step working set fits TILE_BUDGET."""
    def step_bytes(tr):
        s = tr + k_eff - 1
        slab = s * wp_e * c_eff * 6               # bf16 slab + f32 activated copy
        patch = tr * wo * k_eff * c_eff * 2       # one kh-patch live at a time (bf16)
        acc = tr * wo * cout_pad * 4              # f32 accumulator
        outb = 2 * tr * wo * cout_pad * 2         # double-buffered output block
        return slab + patch + acc + outb

    tr = 1
    for cand in range(1, ho + 1):
        if ho % cand == 0 and step_bytes(cand) <= TILE_BUDGET:
            tr = cand
    return tr


# --------------------------------------------------------------------------- Pallas kernel
def _conv_kernel(*refs, k_eff, tr, wo, c_eff, has_in_bn, use_bias, use_bn,
                 out_act, neg_slope):
    """One (batch i, row-tile j) step of a stride-1 k_eff x k_eff convolution.

    x_ref          : (1, Hp, Wp, c_eff) bf16 -- whole padded/s2d image of batch i
                     (constant-in-j index_map -> VMEM-resident, DMA'd once per batch)
    [sc, sh]       : (1, c_eff) f32          -- previous layer's fused BN scale/shift
    w_ref          : (k_eff, k_eff*c_eff, Cp) bf16 -- resident weights
    [b_ref]        : (1, Cp) f32             -- bias (only when the layer has no BN)
    o_ref          : (1, tr, wo, Cp) bf16    -- output tile
    [sum, sq]      : (1, 1, Cp) f32          -- per-batch BN stats (accumulated over j)
    """
    it = iter(refs)
    x_ref = next(it)
    sc_ref = sh_ref = b_ref = sum_ref = sq_ref = None
    if has_in_bn:
        sc_ref, sh_ref = next(it), next(it)
    w_ref = next(it)
    if use_bias:
        b_ref = next(it)
    o_ref = next(it)
    if use_bn:
        sum_ref, sq_ref = next(it), next(it)

    j = pl.program_id(1)
    s = tr + k_eff - 1
    r0 = pl.multiple_of(j * tr, tr)
    x = x_ref[0, pl.ds(r0, s)]                                  # (S, Wp, c_eff) bf16

    # Fused prologue: previous layer's BatchNorm affine + LeakyReLU.
    if has_in_bn:
        sc = sc_ref[...].reshape(1, 1, c_eff)
        sh = sh_ref[...].reshape(1, 1, c_eff)
        a = x.astype(jnp.float32) * sc + sh
        a = jnp.where(a >= 0, a, neg_slope * a).astype(jnp.bfloat16)
    else:
        a = x

    # k_eff dots of (tr*wo, k_eff*c_eff) x (k_eff*c_eff, Cp) -- the shifted-slice
    # relayout is built once per kh and amortised over the whole row tile.
    acc = None
    for kh in range(k_eff):
        rows = a[kh:kh + tr]                                    # (tr, Wp, c_eff)
        patch = jnp.concatenate(
            [rows[:, kw:kw + wo, :] for kw in range(k_eff)], axis=-1)
        patch = patch.reshape(tr * wo, k_eff * c_eff)
        d = jnp.dot(patch, w_ref[kh], preferred_element_type=jnp.float32)
        acc = d if acc is None else acc + d                     # (tr*wo, Cp) f32

    if use_bias:
        acc = acc + b_ref[...]

    if use_bn:
        @pl.when(j == 0)
        def _zero_stats():
            sum_ref[...] = jnp.zeros_like(sum_ref)
            sq_ref[...] = jnp.zeros_like(sq_ref)
        sum_ref[...] += jnp.sum(acc, axis=0, keepdims=True)[None]
        sq_ref[...] += jnp.sum(acc * acc, axis=0, keepdims=True)[None]
    elif out_act:
        # Non-BN layer: bias + LeakyReLU fused in the epilogue.
        acc = jnp.where(acc >= 0, acc, neg_slope * acc)

    o_ref[0] = acc.reshape(tr, wo, -1).astype(o_ref.dtype)


# --------------------------------------------------------------------------- layer wrapper
def conv_layer(x, layer, in_bn=None, *, out_act, extra_pad=0):
    """x: (N, H, W, cin_pad) bf16.  If `in_bn=(scale, shift)` is given, x is the raw
    (pre-BN) output of the previous layer and the BN affine + LeakyReLU are fused into
    this kernel's prologue.  Returns (z, bn) where z is the raw conv output (bf16,
    padded channels exactly zero) and bn is (scale, shift) if this layer has BN."""
    stride = layer["stride"]
    pad = layer["pad"] + extra_pad
    n, h, w, c = x.shape
    assert c == layer["cin_pad"], (c, layer["cin_pad"])

    # Spatial zero-padding of the *activation*.  With a fused BN producer, padding the
    # raw tensor with p = -shift/scale makes the consumer's scale*p + shift == 0.
    if pad:
        if in_bn is None:
            x = jnp.pad(x, ((0, 0), (pad, pad), (pad, pad), (0, 0)))
        else:
            scale, shift = in_bn
            safe = jnp.where(scale != 0.0, scale, 1.0)
            fill = jnp.where(scale != 0.0, -shift / safe, 0.0).astype(x.dtype)
            full = jnp.broadcast_to(fill.reshape(1, 1, 1, c),
                                    (n, h + 2 * pad, w + 2 * pad, c))
            x = lax.dynamic_update_slice(full, x, (0, pad, pad, 0))
    hp, wp = h + 2 * pad, w + 2 * pad

    # Stride-2 4x4 conv -> stride-1 2x2 conv on a space-to-depth input (1x bytes).
    if stride == 2:
        assert hp % 2 == 0 and wp % 2 == 0
        x = x.reshape(n, hp // 2, 2, wp // 2, 2, c)
        x = jnp.transpose(x, (0, 1, 3, 2, 4, 5)).reshape(n, hp // 2, wp // 2, 4 * c)
        k_eff, c_eff = 2, 4 * c
        hp_e, wp_e = hp // 2, wp // 2
        if in_bn is not None:
            in_scale = jnp.tile(in_bn[0], (1, 4))
            in_shift = jnp.tile(in_bn[1], (1, 4))
    else:
        k_eff, c_eff = KSIZE, c
        hp_e, wp_e = hp, wp
        if in_bn is not None:
            in_scale, in_shift = in_bn

    ho, wo = hp_e - k_eff + 1, wp_e - k_eff + 1
    cout_pad = layer["cout_pad"]
    use_bn = layer["use_bn"]
    use_bias = not use_bn
    has_in_bn = in_bn is not None

    tr = _pick_row_tile(ho, wo, wp_e, c_eff, k_eff, cout_pad)
    n_tiles = ho // tr

    kernel = partial(_conv_kernel, k_eff=k_eff, tr=tr, wo=wo, c_eff=c_eff,
                     has_in_bn=has_in_bn, use_bias=use_bias, use_bn=use_bn,
                     out_act=out_act, neg_slope=NEG_SLOPE)

    # Whole image of batch i stays resident across all row tiles (index ignores j).
    in_specs = [pl.BlockSpec((1, hp_e, wp_e, c_eff), lambda i, j: (i, 0, 0, 0))]
    operands = [x]
    if has_in_bn:
        in_specs += [pl.BlockSpec((1, c_eff), lambda i, j: (0, 0)),
                     pl.BlockSpec((1, c_eff), lambda i, j: (0, 0))]
        operands += [in_scale, in_shift]
    w_k = layer["w_k"]
    # Weights / bias are VMEM-resident (constant index_map).
    # TODO(synk): on v7x this could be single-buffered via pipeline_mode=pl.Buffered(1).
    in_specs += [pl.BlockSpec(w_k.shape, lambda i, j: (0, 0, 0))]
    operands += [w_k]
    if use_bias:
        in_specs += [pl.BlockSpec((1, cout_pad), lambda i, j: (0, 0))]
        operands += [layer["bias"]]

    out_shape = [jax.ShapeDtypeStruct((n, ho, wo, cout_pad), jnp.bfloat16)]
    out_specs = [pl.BlockSpec((1, tr, wo, cout_pad), lambda i, j: (i, j, 0, 0))]
    if use_bn:
        # Per-batch stats slots -> the batch axis can stay 'parallel' (v7x megacore).
        out_shape += [jax.ShapeDtypeStruct((n, 1, cout_pad), jnp.float32)] * 2
        out_specs += [pl.BlockSpec((1, 1, cout_pad), lambda i, j: (i, 0, 0))] * 2

    sem = ("parallel", "arbitrary") if use_bn else ("parallel", "parallel")
    res = pl.pallas_call(
        kernel,
        grid=(n, n_tiles),
        in_specs=in_specs,
        out_specs=out_specs,
        out_shape=out_shape,
        compiler_params=pltpu.CompilerParams(
            dimension_semantics=sem, vmem_limit_bytes=VMEM_LIMIT),
    )(*operands)

    if not use_bn:
        return res[0], None

    z, s, sq = res
    cnt = float(n * ho * wo)
    s = jnp.sum(s, axis=0)                                     # (1, cout_pad)
    sq = jnp.sum(sq, axis=0)
    mean = s / cnt
    var = jnp.maximum(sq / cnt - mean * mean, 0.0)
    scale = layer["gamma"] * lax.rsqrt(var + BN_EPS)           # padded lanes: gamma=0 -> 0
    shift = layer["beta"] - mean * scale
    return z, (scale, shift)


# --------------------------------------------------------------------------- forward
def discriminator_forward(x, y, params):
    # x: (N, Cx, H, W, 1), y: (N, Cy, H, W, 1)   (PyTorch layout)
    out = jnp.concatenate([x[..., 0], y[..., 0]], axis=1)           # cat(dim=1).squeeze(-1)
    out = jnp.transpose(out, (0, 2, 3, 1)).astype(jnp.bfloat16)     # NCHW -> NHWC, bf16
    out = _pad_channels(out, params["downs"][0]["cin_pad"])

    downs = params["downs"]
    bn = None
    for lyr in downs[:-1]:
        out, bn = conv_layer(out, lyr, in_bn=bn, out_act=True)
    # nn.ZeroPad2d(1) + last Downsampler (conv pad 0) -> effective pad 1
    out, bn = conv_layer(out, downs[-1], in_bn=bn, out_act=True, extra_pad=1)
    # nn.ZeroPad2d(1) + final Conv2d (no BN / act)
    out, _ = conv_layer(out, params["final"], in_bn=bn, out_act=False, extra_pad=1)

    out = out[..., :params["final"]["cout"]]                        # drop lane padding
    out = jnp.transpose(out, (0, 3, 1, 2))[..., None]               # NCHW + unsqueeze(-1)
    return out.astype(jnp.float32)


# --------------------------------------------------------------------------- params
def _prep_weight(w_oihw, cin_pad, cout_pad, stride):
    """PyTorch (Cout, Cin, 4, 4) -> kernel layout (k_eff, k_eff*C_eff, Cout_pad) bf16."""
    cout, cin, _, _ = w_oihw.shape
    w = jnp.transpose(w_oihw, (2, 3, 1, 0))                               # (kh, kw, ci, co)
    w = jnp.pad(w, ((0, 0), (0, 0), (0, cin_pad - cin), (0, cout_pad - cout)))
    if stride == 2:
        # kh = 2*dh + a, kw = 2*dw + b; space-to-depth channel order is (a, b, ci).
        w = w.reshape(2, 2, 2, 2, cin_pad, cout_pad)                      # (dh, a, dw, b, ci, co)
        w = jnp.transpose(w, (0, 2, 1, 3, 4, 5))                          # (dh, dw, a, b, ci, co)
        w = w.reshape(2, 2 * 4 * cin_pad, cout_pad)
    else:
        w = w.reshape(KSIZE, KSIZE * cin_pad, cout_pad)
    return w.astype(jnp.bfloat16)


def _make_layer(w_oihw, bias_nat, use_bn, stride, pad, cin_pad, cout_pad):
    cout, cin = int(w_oihw.shape[0]), int(w_oihw.shape[1])
    return dict(
        w_oihw=w_oihw, bias_nat=bias_nat, use_bn=use_bn, stride=stride, pad=pad,
        cin=cin, cout=cout, cin_pad=cin_pad, cout_pad=cout_pad,
        w_k=_prep_weight(w_oihw, cin_pad, cout_pad, stride),
        bias=jnp.zeros((1, cout_pad), jnp.float32).at[0, :cout].set(bias_nat),
        gamma=jnp.zeros((1, cout_pad), jnp.float32).at[0, :cout].set(1.0),
        beta=jnp.zeros((1, cout_pad), jnp.float32),
    )


def init_params(key, in_ch, tgt_ch, downsample_nodes, batchnorms, paddings, strides):
    nodes = [in_ch + tgt_ch] + list(downsample_nodes)
    nl = len(nodes) - 1
    layer_strides = [int(strides[i]) for i in range(nl)]
    # Channel-pad chain: stride-2 layers only need cin padded to 32 (post-s2d lane = 128);
    # stride-1 layers pad cin to 128.  Layer i's cout_pad == layer i+1's cin_pad.
    cin_pads = [_round_up(nodes[i], 32 if layer_strides[i] == 2 else LANE)
                for i in range(nl)]
    final_cin_pad = _round_up(nodes[-1], LANE)
    cout_pads = cin_pads[1:] + [final_cin_pad]

    downs = []
    for i in range(nl):
        key, kw_, kb_ = jax.random.split(key, 3)
        cin, cout = nodes[i], nodes[i + 1]
        use_bn = bool(batchnorms[i])
        w = 0.02 * jax.random.normal(kw_, (cout, cin, KSIZE, KSIZE), jnp.float32)
        if use_bn:
            b = jnp.zeros((cout,), jnp.float32)      # conv bias disabled when BN is on
        else:
            bound = 1.0 / math.sqrt(cin * KSIZE * KSIZE)
            b = jax.random.uniform(kb_, (cout,), jnp.float32, -bound, bound)
        downs.append(_make_layer(w, b, use_bn, layer_strides[i], int(paddings[i]),
                                 cin_pads[i], cout_pads[i]))

    # final Conv2d(nodes[-1], strides[-1], 4): weight ~ N(0, 0.02), default bias init.
    key, kw_, kb_ = jax.random.split(key, 3)
    cin, cout = nodes[-1], int(strides[-1])
    w = 0.02 * jax.random.normal(kw_, (cout, cin, KSIZE, KSIZE), jnp.float32)
    bound = 1.0 / math.sqrt(cin * KSIZE * KSIZE)
    b = jax.random.uniform(kb_, (cout,), jnp.float32, -bound, bound)
    final = _make_layer(w, b, False, 1, 0, final_cin_pad, LANE)
    return dict(downs=downs, final=final)


# --------------------------------------------------------------------------- pure-JAX reference
def _ref_block(x_bf16, lyr, act):
    w = jnp.transpose(lyr["w_oihw"], (2, 3, 1, 0)).astype(jnp.bfloat16)   # HWIO
    z = lax.conv_general_dilated(
        x_bf16, w, (lyr["stride"], lyr["stride"]),
        ((lyr["pad"], lyr["pad"]), (lyr["pad"], lyr["pad"])),
        dimension_numbers=("NHWC", "HWIO", "NHWC"),
        preferred_element_type=jnp.float32)
    if lyr["use_bn"]:
        m = z.size // z.shape[-1]
        s = jnp.sum(z, axis=(0, 1, 2))
        sq = jnp.sum(z * z, axis=(0, 1, 2))
        mean = s / m
        var = jnp.maximum(sq / m - mean * mean, 0.0)
        zb = z.astype(jnp.bfloat16).astype(jnp.float32)       # mimic bf16 storage of z
        z = (zb - mean) * lax.rsqrt(var + BN_EPS)             # gamma=1, beta=0
    else:
        z = z + lyr["bias_nat"].reshape(1, 1, 1, -1)
    if act:
        z = jnp.where(z >= 0, z, NEG_SLOPE * z)
    return z.astype(jnp.bfloat16)


def reference_forward(x, y, params):
    out = jnp.concatenate([x[..., 0], y[..., 0]], axis=1)
    out = jnp.transpose(out, (0, 2, 3, 1)).astype(jnp.bfloat16)
    for lyr in params["downs"][:-1]:
        out = _ref_block(out, lyr, act=True)
    out = jnp.pad(out, ((0, 0), (1, 1), (1, 1), (0, 0)))
    out = _ref_block(out, params["downs"][-1], act=True)
    out = jnp.pad(out, ((0, 0), (1, 1), (1, 1), (0, 0)))
    out = _ref_block(out, params["final"], act=False)
    out = jnp.transpose(out, (0, 3, 1, 2))[..., None]
    return out.astype(jnp.float32)


# --------------------------------------------------------------------------- demo
if __name__ == "__main__":
    key = jax.random.PRNGKey(0)
    kx, ky, kp = jax.random.split(key, 3)

    # Small shapes consistent with the module structure (4 downsamplers + pad + 4x4 conv).
    N, H, W = 2, 32, 32
    in_c, tgt_c = 3, 2                      # input_shape[0], target_shape[0]
    downsample_nodes = [8, 16, 32, 64]
    batchnorms = [False, True, True, True]
    paddings = [1, 1, 1, 0]
    strides = [2, 2, 2, 1, 1]

    x = jax.random.normal(kx, (N, in_c, H, W, 1), jnp.float32)
    y = jax.random.normal(ky, (N, tgt_c, H, W, 1), jnp.float32)

    params = init_params(kp, in_c, tgt_c, downsample_nodes, batchnorms, paddings, strides)

    out = jax.block_until_ready(discriminator_forward(x, y, params))

    # 32 -> 16 -> 8 -> 4 -> pad 6 -> 3 -> pad 5 -> 2  => (N, 1, 2, 2, 1)
    assert out.shape == (N, 1, 2, 2, 1), out.shape
    assert bool(jnp.all(jnp.isfinite(out)))

    ref = jax.block_until_ready(reference_forward(x, y, params))
    max_err = float(jnp.max(jnp.abs(out - ref)))
    tol = 0.1 * (1.0 + float(jnp.max(jnp.abs(ref))))
    assert max_err < tol, (max_err, tol)

    print("KERNEL_OK")
</pallas_src>

<mosaic_0001>
module attributes {stable_mosaic.version = 11 : i64} {
  func.func @_conv_kernel(%arg0: i32, %arg1: i32, %arg2: memref<1x17x17x128xbf16, #tpu.memory_space<vmem>>, %arg3: memref<2x256x32xbf16, #tpu.memory_space<vmem>>, %arg4: memref<1x32xf32, #tpu.memory_space<vmem>>, %arg5: memref<1x16x16x32xbf16, #tpu.memory_space<vmem>>) attributes {dimension_semantics = [#tpu.dimension_semantics<parallel>, #tpu.dimension_semantics<parallel>], iteration_bounds = array<i64: 2, 1>, scalar_prefetch = 0 : i64, scratch_operands = 0 : i64, tpu.core_type = #tpu.core_type<tc>, window_params = [{transform_indices = @transform_0, window_bounds = array<i64: 1, 17, 17, 128>}, {pipeline_mode = #tpu.pipeline_mode<synchronous>, transform_indices = @transform_1, window_bounds = array<i64: 2, 256, 32>}, {pipeline_mode = #tpu.pipeline_mode<synchronous>, transform_indices = @transform_2, window_bounds = array<i64: 1, 32>}, {transform_indices = @transform_3, window_bounds = array<i64: 1, 16, 16, 32>}]} {
    %c16_i32 = arith.constant 16 : i32
    %0 = arith.muli %arg1, %c16_i32 : i32
    %1 = tpu.assume_multiple %0, 16 : i32
    %c0 = arith.constant 0 : index
    %2 = arith.index_cast %1 : i32 to index
    %c0_0 = arith.constant 0 : index
    %c0_1 = arith.constant 0 : index
    %3 = vector.load %arg2[%c0, %2, %c0_0, %c0_1] : memref<1x17x17x128xbf16, #tpu.memory_space<vmem>>, vector<1x17x17x128xbf16>
    %4 = vector.shape_cast %3 : vector<1x17x17x128xbf16> to vector<17x17x128xbf16>
    %5 = vector.extract_strided_slice %4 {offsets = [0, 0, 0], sizes = [16, 17, 128], strides = [1, 1, 1]} : vector<17x17x128xbf16> to vector<16x17x128xbf16>
    %6 = vector.extract_strided_slice %5 {offsets = [0, 0, 0], sizes = [16, 16, 128], strides = [1, 1, 1]} : vector<16x17x128xbf16> to vector<16x16x128xbf16>
    %7 = vector.extract_strided_slice %5 {offsets = [0, 1, 0], sizes = [16, 16, 128], strides = [1, 1, 1]} : vector<16x17x128xbf16> to vector<16x16x128xbf16>
    %8 = tpu.concatenate %6, %7 in 2 : vector<16x16x128xbf16>, vector<16x16x128xbf16> -> vector<16x16x256xbf16>
    %9 = vector.shape_cast %8 : vector<16x16x256xbf16> to vector<256x256xbf16>
    %c0_2 = arith.constant 0 : index
    %c0_3 = arith.constant 0 : index
    %c0_4 = arith.constant 0 : index
    %10 = vector.load %arg3[%c0_2, %c0_3, %c0_4] : memref<2x256x32xbf16, #tpu.memory_space<vmem>>, vector<1x256x32xbf16>
    %11 = vector.shape_cast %10 : vector<1x256x32xbf16> to vector<256x32xbf16>
    %cst = arith.constant dense<0.000000e+00> : vector<256x32xf32>
    %12 = tpu.matmul %9, %11, %cst {dimension_numbers = #tpu.dot_dimension_numbers<[1], [0], [0], [1], [0, 0, 1, 1], [], []>} : vector<256x256xbf16>, vector<256x32xbf16>, vector<256x32xf32> -> vector<256x32xf32>
    %13 = vector.extract_strided_slice %4 {offsets = [1, 0, 0], sizes = [16, 17, 128], strides = [1, 1, 1]} : vector<17x17x128xbf16> to vector<16x17x128xbf16>
    %14 = vector.extract_strided_slice %13 {offsets = [0, 0, 0], sizes = [16, 16, 128], strides = [1, 1, 1]} : vector<16x17x128xbf16> to vector<16x16x128xbf16>
    %15 = vector.extract_strided_slice %13 {offsets = [0, 1, 0], sizes = [16, 16, 128], strides = [1, 1, 1]} : vector<16x17x128xbf16> to vector<16x16x128xbf16>
    %16 = tpu.concatenate %14, %15 in 2 : vector<16x16x128xbf16>, vector<16x16x128xbf16> -> vector<16x16x256xbf16>
    %17 = vector.shape_cast %16 : vector<16x16x256xbf16> to vector<256x256xbf16>
    %c1 = arith.constant 1 : index
    %c0_5 = arith.constant 0 : index
    %c0_6 = arith.constant 0 : index
    %18 = vector.load %arg3[%c1, %c0_5, %c0_6] : memref<2x256x32xbf16, #tpu.memory_space<vmem>>, vector<1x256x32xbf16>
    %19 = vector.shape_cast %18 : vector<1x256x32xbf16> to vector<256x32xbf16>
    %cst_7 = arith.constant dense<0.000000e+00> : vector<256x32xf32>
    %20 = tpu.matmul %17, %19, %cst_7 {dimension_numbers = #tpu.dot_dimension_numbers<[1], [0], [0], [1], [0, 0, 1, 1], [], []>} : vector<256x256xbf16>, vector<256x32xbf16>, vector<256x32xf32> -> vector<256x32xf32>
    %21 = arith.addf %12, %20 : vector<256x32xf32>
    %c0_8 = arith.constant 0 : index
    %c0_9 = arith.constant 0 : index
    %22 = vector.load %arg4[%c0_8, %c0_9] : memref<1x32xf32, #tpu.memory_space<vmem>>, vector<1x32xf32>
    %23 = vector.broadcast %22 : vector<1x32xf32> to vector<256x32xf32>
    %24 = arith.addf %21, %23 : vector<256x32xf32>
    %cst_10 = arith.constant 0.000000e+00 : f32
    %25 = vector.broadcast %cst_10 : f32 to vector<256x32xf32>
    %26 = arith.cmpf oge, %24, %25 : vector<256x32xf32>
    %cst_11 = arith.constant 2.000000e-01 : f32
    %27 = vector.broadcast %cst_11 : f32 to vector<256x32xf32>
    %28 = arith.mulf %27, %24 : vector<256x32xf32>
    %29 = arith.select %26, %24, %28 : vector<256x32xi1>, vector<256x32xf32>
    %30 = vector.shape_cast %29 : vector<256x32xf32> to vector<16x16x32xf32>
    %31 = arith.truncf %30 : vector<16x16x32xf32> to vector<16x16x32xbf16>
    %c0_12 = arith.constant 0 : index
    %c0_13 = arith.constant 0 : index
    %c0_14 = arith.constant 0 : index
    %c0_15 = arith.constant 0 : index
    %32 = vector.load %arg5[%c0_12, %c0_13, %c0_14, %c0_15] : memref<1x16x16x32xbf16, #tpu.memory_space<vmem>>, vector<1x16x16x32xbf16>
    %33 = vector.shape_cast %32 : vector<1x16x16x32xbf16> to vector<16x16x32xbf16>
    %34 = vector.shape_cast %31 : vector<16x16x32xbf16> to vector<1x16x16x32xbf16>
    tpu.vector_store %arg5[%c0_12, %c0_13, %c0_14, %c0_15], %34 {strides = array<i32>} : memref<1x16x16x32xbf16, #tpu.memory_space<vmem>>, vector<1x16x16x32xbf16>,
    return
  }
  func.func @transform_0(%arg0: i32, %arg1: i32) -> (i32, i32, i32, i32) {
    %c0_i32 = arith.constant 0 : i32
    %c0_i32_0 = arith.constant 0 : i32
    %c0_i32_1 = arith.constant 0 : i32
    %c0_i32_2 = arith.constant 0 : i32
    return %arg0, %c0_i32, %c0_i32_0, %c0_i32_1 : i32, i32, i32, i32
  }
  func.func @transform_1(%arg0: i32, %arg1: i32) -> (i32, i32, i32) {
    %c0_i32 = arith.constant 0 : i32
    %c0_i32_0 = arith.constant 0 : i32
    %c0_i32_1 = arith.constant 0 : i32
    %c0_i32_2 = arith.constant 0 : i32
    return %c0_i32, %c0_i32_0, %c0_i32_1 : i32, i32, i32
  }
  func.func @transform_2(%arg0: i32, %arg1: i32) -> (i32, i32) {
    %c0_i32 = arith.constant 0 : i32
    %c0_i32_0 = arith.constant 0 : i32
    %c0_i32_1 = arith.constant 0 : i32
    return %c0_i32, %c0_i32_0 : i32, i32
  }
  func.func @transform_3(%arg0: i32, %arg1: i32) -> (i32, i32, i32, i32) {
    %c0_i32 = arith.constant 0 : i32
    %c0_i32_0 = arith.constant 0 : i32
    %c0_i32_1 = arith.constant 0 : i32
    return %arg0, %arg1, %c0_i32, %c0_i32_0 : i32, i32, i32, i32
  }
}

</mosaic_0001>

<llo_original>
// kernel: tpu_custom_call.1
$region0: #{tpu_custom_call.1}
  #allocation0 [shape = 'u32[]', space=smem, size = 0x4, offset = 0x4, fixed_abs, tag = 'smem constant byte address 0x4 - core index']
  #allocation1 [shape = 'u32[144,128]{1,0:T(1,128)}', space=vmem, size = 0x12000, scoped, tag = 'internal scratch']
  %s0 = inlined_call_operand.hbm [shape: bf16[2,17,17,128], index: 0, kind: input, shape index: {}]
  %s1 = inlined_call_operand.hbm [shape: bf16[2,256,32], index: 1, kind: input, shape index: {}]
  %s2 = inlined_call_operand.hbm [shape: f32[1,32], index: 2, kind: input, shape index: {}]
  %s3 = inlined_call_operand.hbm [shape: bf16[2,16,16,32], index: 3, kind: output, shape index: {}]
  %s4 = sld [smem:[#allocation0]]
  $region57: #{tpu_custom_call.1} parent=0
    _
  %s6 = ssub.s32 1, %s4
  %s7 = scalar_select 0, %s6, %s4
  $region1: #{tpu_custom_call.1} parent=0
    #allocation2 [shape = 'u8[208896]{0}', space=vmem, size = 0x33000, scoped, tag = 'input window, operand 0']
    #allocation3 [shape = 's32[2]{0}', space=sflag, size = 0x8, scoped, tag = 'scoped memory for tpu_custom_call.1']
    #allocation4 [shape = 's32[2]{0}', space=sflag, size = 0x8, scoped, tag = 'scoped memory for tpu_custom_call.1']
    #allocation5 [shape = 'u8[131072]{0}', space=vmem, size = 0x20000, scoped, tag = 'input window, operand 1, single buffered']
    #allocation6 [shape = 's32[1]{0}', space=sflag, size = 0x4, scoped, tag = 'scoped memory for tpu_custom_call.1']
    #allocation7 [shape = 'u8[512]{0}', space=vmem, size = 0x400, scoped, tag = 'input window, operand 2, single buffered']
    #allocation8 [shape = 'u8[131072]{0}', space=vmem, size = 0x20000, scoped, tag = 'output window, operand 0']
    %8 = vsyncpa [#allocation3], 0
    %s9 = scalar_lea.sflag [#allocation3], 1
    %10 = vsyncpa %s9, 0
    %11 = vsyncpa [#allocation6], 0
    %12 = vsyncpa [#allocation4], 0
    %s13 = scalar_lea.sflag [#allocation4], 1
    %14 = vsyncpa %s13, 0
    loop: start=0, step=1, limit=4
    $region2: #{tpu_custom_call.1} parent=1 // loop_pre_header
      _
    $region3: #{tpu_custom_call.1} parent=1 // loop_header
      %s16 = sphi 0, %s20
      %p17 = scmp.ge.s32.totalorder %s16, 4
      %s23 = sphi 0, %s35
      %s24 = sphi 0, %s31
      %s25 = sphi 0, %s23
      %s26 = sphi 0, %s24
      %s27 = sphi 0, %s25
      %s28 = sphi 0, %s26
      %s38 = sphi 0, %s40
      %s41 = sphi 0, %s38
      %s42 = sphi 0, %s41
      %s58 = sphi 0, %s42
      %s62 = sphi 0, %s62
      %s64 = sphi 0, %s62
      %s65 = sphi 0, %s64
      %s79 = sphi 0, %s65
      %s83 = sphi 0, %s83
      %s85 = sphi 0, %s83
      %s86 = sphi 0, %s85
      %s100 = sphi 0, %s86
      %s108 = sphi 0, %s110
      %s111 = sphi 0, %s108
      %s112 = sphi 0, %s111
      %s128 = sphi 0, %s112
    $region4: #{tpu_custom_call.1} parent=1 // loop_header_branch
      %19 = sbr.rel (%p17) target = $region8
    $region5: #{tpu_custom_call.1} parent=1 // loop_body
      %s21 = ssub.s32 %s16, 1
      %s22 = ssub.s32 %s16, 2
      %s29 = sadd.s32 1, %s24
      %p30 = scmp.ge.s32.totalorder %s29, 1
      %s31 = scalar_select %p30, 0, %s29
      %s32 = sadd.s32 1, %s23
      %s33 = scalar_select %p30, %s32, %s23
      %p34 = scmp.ge.s32.totalorder %s33, 2
      %s35 = scalar_select %p34, 0, %s33
      %s36 = ssub.s32 %s23, %s35
      %p37 = scmp.eq.s32.totalorder %s36, 0
      %s39 = sadd.s32 %s38, 1
      %s40 = scalar_select %p37, %s38, %s39
      %p43 = pneg %p37
      %p44 = scmp.eq.s32.totalorder %s16, 1
      %p45 = por %p43, %p44
      %p46 = scmp.ne.s32.totalorder %s38, %s41
      %p47 = scmp.eq.s32.totalorder %s16, 0
      %p48 = por %p46, %p47
      %p49 = scmp.ne.s32.totalorder %s38, %s41
      %p50 = scmp.eq.s32.totalorder %s21, 1
      %p51 = por %p49, %p50
      %p52 = scmp.ne.s32.totalorder %s41, %s42
      %p53 = scmp.eq.s32.totalorder %s21, 0
      %p54 = por %p52, %p53
      %p55 = scmp.ne.s32.totalorder %s41, %s42
      %p56 = scmp.eq.s32.totalorder %s22, 1
      %p57 = por %p55, %p56
      %p59 = scmp.ne.s32.totalorder %s42, %s58
      %p60 = scmp.eq.s32.totalorder %s22, 0
      %p61 = por %p59, %p60
      %s63 = sadd.s32 %s62, 1
      %p66 = scmp.eq.s32.totalorder %s16, 1
      %p67 = scmp.ne.s32.totalorder %s62, %s64
      %p68 = scmp.eq.s32.totalorder %s16, 0
      %p69 = por %p67, %p68
      %p70 = scmp.ne.s32.totalorder %s62, %s64
      %p71 = scmp.eq.s32.totalorder %s21, 1
      %p72 = por %p70, %p71
      %p73 = scmp.ne.s32.totalorder %s64, %s65
      %p74 = scmp.eq.s32.totalorder %s21, 0
      %p75 = por %p73, %p74
      %p76 = scmp.ne.s32.totalorder %s64, %s65
      %p77 = scmp.eq.s32.totalorder %s22, 1
      %p78 = por %p76, %p77
      %p80 = scmp.ne.s32.totalorder %s65, %s79
      %p81 = scmp.eq.s32.totalorder %s22, 0
      %p82 = por %p80, %p81
      %s84 = sadd.s32 %s83, 1
      %p87 = scmp.eq.s32.totalorder %s16, 1
      %p88 = scmp.ne.s32.totalorder %s83, %s85
      %p89 = scmp.eq.s32.totalorder %s16, 0
      %p90 = por %p88, %p89
      %p91 = scmp.ne.s32.totalorder %s83, %s85
      %p92 = scmp.eq.s32.totalorder %s21, 1
      %p93 = por %p91, %p92
      %p94 = scmp.ne.s32.totalorder %s85, %s86
      %p95 = scmp.eq.s32.totalorder %s21, 0
      %p96 = por %p94, %p95
      %p97 = scmp.ne.s32.totalorder %s85, %s86
      %p98 = scmp.eq.s32.totalorder %s22, 1
      %p99 = por %p97, %p98
      %p101 = scmp.ne.s32.totalorder %s86, %s100
      %p102 = scmp.eq.s32.totalorder %s22, 0
      %p103 = por %p101, %p102
      %s104 = ssub.s32 %s23, %s35
      %s105 = ssub.s32 %s24, %s31
      %s106 = sor.u32 %s104, %s105
      %p107 = scmp.eq.s32.totalorder %s106, 0
      %s109 = sadd.s32 %s108, 1
      %s110 = scalar_select %p107, %s108, %s109
      %p113 = pneg %p107
      %p114 = scmp.eq.s32.totalorder %s16, 1
      %p115 = por %p113, %p114
      %p116 = scmp.ne.s32.totalorder %s108, %s111
      %p117 = scmp.eq.s32.totalorder %s16, 0
      %p118 = por %p116, %p117
      %p119 = scmp.ne.s32.totalorder %s108, %s111
      %p120 = scmp.eq.s32.totalorder %s21, 1
      %p121 = por %p119, %p120
      %p122 = scmp.ne.s32.totalorder %s111, %s112
      %p123 = scmp.eq.s32.totalorder %s21, 0
      %p124 = por %p122, %p123
      %p125 = scmp.ne.s32.totalorder %s111, %s112
      %p126 = scmp.eq.s32.totalorder %s22, 1
      %p127 = por %p125, %p126
      %p129 = scmp.ne.s32.totalorder %s112, %s128
      %p130 = scmp.eq.s32.totalorder %s22, 0
      %p131 = por %p129, %p130
      %p132 = scmp.le.s32.totalorder 1, %s16
      %p133 = scmp.lt.s32.totalorder %s16, 3
      %p134 = pnand %p132, %p133
      %p135 = pneg %p134
      // Predicated region
      $region9: #{tpu_custom_call.1} parent=5 // pred_check
        _
      $region10: #{tpu_custom_call.1} parent=5 // pred_check_branch
        %137 = sbr.rel (%p134) target = $region12
      $region11: #{tpu_custom_call.1} parent=5 // pred_region
        %s138 = ssub.s32 %s16, 1
        // Predicated region
        $region13: #{tpu_custom_call.1} parent=11 // pred_check
          %p139 = pneg %p75
        $region14: #{tpu_custom_call.1} parent=11 // pred_check_branch
          %141 = sbr.rel (%p139) target = $region16
        $region15: #{tpu_custom_call.1} parent=11 // pred_region
          %s143 = ssub.s32 4096, 4096
          %144 = vsyncadd [#allocation6], %s143
          %s145 = sshll.u32 [#allocation5], 4
          %s146 = int_to_ptr.vmem [resolvable:$true] %s145
          %151 = dma.hbm_to_vmem [thread:$0]  %s1, 4096, %s146, [#allocation6], 64, 64, 4
        $region16: #{tpu_custom_call.1} parent=11 // pred_fallthru
          _
        // Predicated region
        $region17: #{tpu_custom_call.1} parent=11 // pred_check
          %p152 = pneg %p96
        $region18: #{tpu_custom_call.1} parent=11 // pred_check_branch
          %154 = sbr.rel (%p152) target = $region20
        $region19: #{tpu_custom_call.1} parent=11 // pred_region
          %s156 = ssub.s32 16, 16
          %157 = vsyncadd [#allocation6], %s156
          %s159 = sshll.u32 [#allocation7], 4
          %s160 = int_to_ptr.vmem [resolvable:$true] %s159
          %162 = dma.hbm_to_vmem [thread:$0]  %s2, 16, %s160, [#allocation6]
        $region20: #{tpu_custom_call.1} parent=11 // pred_fallthru
          _
      $region12: #{tpu_custom_call.1} parent=5 // pred_fallthru
        _
      %p163 = scmp.lt.s32.totalorder %s16, 2
      // Predicated region
      $region21: #{tpu_custom_call.1} parent=5 // pred_check
        %p164 = pneg %p163
      $region22: #{tpu_custom_call.1} parent=5 // pred_check_branch
        %166 = sbr.rel (%p164) target = $region24
      $region23: #{tpu_custom_call.1} parent=5 // pred_region
        // Predicated region
        $region25: #{tpu_custom_call.1} parent=23 // pred_check
          %p167 = pneg %p48
        $region26: #{tpu_custom_call.1} parent=23 // pred_check_branch
          %169 = sbr.rel (%p167) target = $region28
        $region27: #{tpu_custom_call.1} parent=23 // pred_region
          %s170 = sand.u32 %s38, 1
          %s171 = scalar_lea.sflag [#allocation3], %s170
          %s172 = sand.u32 %s38, 1
          %s173 = smul.addr %s172, 204
          %s174 = scalar_lea.vmem [#allocation2], %s173
          %s176 = ssub.s32 3264, 3264
          %177 = vsyncadd %s171, %s176
          %s178 = smul.addr %s23, 51
          %s179 = smul.addr %s178, 64
          %s180 = scalar_lea.hbm %s0, %s179
          %s181 = sshll.u32 %s174, 4
          %s182 = int_to_ptr.vmem [resolvable:$true] %s181
          %187 = dma.hbm_to_vmem [thread:$0]  %s180, 3264, %s182, %s171, 64, 64, 4
        $region28: #{tpu_custom_call.1} parent=23 // pred_fallthru
          _
      $region24: #{tpu_custom_call.1} parent=5 // pred_fallthru
        _
      %p188 = scmp.le.s32.totalorder 1, %s16
      %p189 = scmp.lt.s32.totalorder %s16, 3
      %p190 = pnand %p188, %p189
      %p191 = pneg %p190
      // Predicated region
      $region29: #{tpu_custom_call.1} parent=5 // pred_check
        _
      $region30: #{tpu_custom_call.1} parent=5 // pred_check_branch
        %193 = sbr.rel (%p190) target = $region32
      $region31: #{tpu_custom_call.1} parent=5 // pred_region
        %s194 = ssub.s32 %s16, 1
        %s195 = sand.u32 %s41, 1
        %s196 = scalar_lea.sflag [#allocation3], %s195
        %s197 = sand.u32 %s41, 1
        %s198 = smul.addr %s197, 204
        %s199 = scalar_lea.vmem [#allocation2], %s198
        // Predicated region
        $region33: #{tpu_custom_call.1} parent=31 // pred_check
          %p200 = pneg %p54
        $region34: #{tpu_custom_call.1} parent=31 // pred_check_branch
          %202 = sbr.rel (%p200) target = $region36
        $region35: #{tpu_custom_call.1} parent=31 // pred_region
          %203 = dma.done %s196, 3264
        $region36: #{tpu_custom_call.1} parent=31 // pred_fallthru
          _
        // Predicated region
        $region37: #{tpu_custom_call.1} parent=31 // pred_check
          %p204 = pneg %p75
        $region38: #{tpu_custom_call.1} parent=31 // pred_check_branch
          %206 = sbr.rel (%p204) target = $region40
        $region39: #{tpu_custom_call.1} parent=31 // pred_region
          %207 = dma.done [#allocation6], 4096
        $region40: #{tpu_custom_call.1} parent=31 // pred_fallthru
          _
        // Predicated region
        $region41: #{tpu_custom_call.1} parent=31 // pred_check
          %p208 = pneg %p96
        $region42: #{tpu_custom_call.1} parent=31 // pred_check_branch
          %210 = sbr.rel (%p208) target = $region44
        $region43: #{tpu_custom_call.1} parent=31 // pred_region
          %211 = dma.done [#allocation6], 16
        $region44: #{tpu_custom_call.1} parent=31 // pred_fallthru
          _
        %s212 = sand.u32 %s41, 1
        %s213 = scalar_lea.sflag [#allocation3], %s212
        %s214 = sand.u32 %s41, 1
        %s215 = smul.addr %s214, 204
        %s216 = scalar_lea.vmem [#allocation2], %s215
        %p217 = pneg %p54
        %p218 = pneg %p51
        %p219 = pneg %p75
        %p220 = pneg %p72
        %p221 = pneg %p96
        %p222 = pneg %p93
        %p223 = pneg %p124
        %p224 = pneg %p121
        %s225 = sand.u32 %s111, 1
        %s226 = scalar_lea.sflag [#allocation4], %s225
        %s227 = sand.u32 %s111, 1
        %s228 = smul.addr %s227, 128
        %s229 = scalar_lea.vmem [#allocation8], %s228
        %s230 = smul.u32 16, %s26
        %s232 = smul.u32 %s26, 16
        %s233 = smul.u32 %s232, 3
        %s234 = smul.addr %s233, 4
        %s235 = scalar_lea.vmem %s199, %s234 [#allocation2]
        %v236 = vld [vmem:[%s235] sm:$0xf]
        %v237 = vld [vmem:[%s235 + $0x4] sm:$0xf]
        %v238 = vld [vmem:[%s235 + $0x8] sm:$0x1]
        %v239 = vld [vmem:[%s235 + $0xc] sm:$0xf]
        %v240 = vld [vmem:[%s235 + $0x10] sm:$0xf]
        %v241 = vld [vmem:[%s235 + $0x14] sm:$0x1]
        %v242 = vld [vmem:[%s235 + $0x18] sm:$0xf]
        %v243 = vld [vmem:[%s235 + $0x1c] sm:$0xf]
        %v244 = vld [vmem:[%s235 + $0x20] sm:$0x1]
        %v245 = vld [vmem:[%s235 + $0x24] sm:$0xf]
        %v246 = vld [vmem:[%s235 + $0x28] sm:$0xf]
        %v247 = vld [vmem:[%s235 + $0x2c] sm:$0x1]
        %v248 = vld [vmem:[%s235 + $0x30] sm:$0xf]
        %v249 = vld [vmem:[%s235 + $0x34] sm:$0xf]
        %v250 = vld [vmem:[%s235 + $0x38] sm:$0x1]
        %v251 = vld [vmem:[%s235 + $0x3c] sm:$0xf]
        %v252 = vld [vmem:[%s235 + $0x40] sm:$0xf]
        %v253 = vld [vmem:[%s235 + $0x44] sm:$0x1]
        %v254 = vld [vmem:[%s235 + $0x48] sm:$0xf]
        %v255 = vld [vmem:[%s235 + $0x4c] sm:$0xf]
        %v256 = vld [vmem:[%s235 + $0x50] sm:$0x1]
        %v257 = vld [vmem:[%s235 + $0x54] sm:$0xf]
        %v258 = vld [vmem:[%s235 + $0x58] sm:$0xf]
        %v259 = vld [vmem:[%s235 + $0x5c] sm:$0x1]
        %v260 = vld [vmem:[%s235 + $0x60] sm:$0xf]
        %v261 = vld [vmem:[%s235 + $0x64] sm:$0xf]
        %v262 = vld [vmem:[%s235 + $0x68] sm:$0x1]
        %v263 = vld [vmem:[%s235 + $0x6c] sm:$0xf]
        %v264 = vld [vmem:[%s235 + $0x70] sm:$0xf]
        %v265 = vld [vmem:[%s235 + $0x74] sm:$0x1]
        %v266 = vld [vmem:[%s235 + $0x78] sm:$0xf]
        %v267 = vld [vmem:[%s235 + $0x7c] sm:$0xf]
        %v268 = vld [vmem:[%s235 + $0x80] sm:$0x1]
        %v269 = vld [vmem:[%s235 + $0x84] sm:$0xf]
        %v270 = vld [vmem:[%s235 + $0x88] sm:$0xf]
        %v271 = vld [vmem:[%s235 + $0x8c] sm:$0x1]
        %v272 = vld [vmem:[%s235 + $0x90] sm:$0xf]
        %v273 = vld [vmem:[%s235 + $0x94] sm:$0xf]
        %v274 = vld [vmem:[%s235 + $0x98] sm:$0x1]
        %v275 = vld [vmem:[%s235 + $0x9c] sm:$0xf]
        %v276 = vld [vmem:[%s235 + $0xa0] sm:$0xf]
        %v277 = vld [vmem:[%s235 + $0xa4] sm:$0x1]
        %v278 = vld [vmem:[%s235 + $0xa8] sm:$0xf]
        %v279 = vld [vmem:[%s235 + $0xac] sm:$0xf]
        %v280 = vld [vmem:[%s235 + $0xb0] sm:$0x1]
        %v281 = vld [vmem:[%s235 + $0xb4] sm:$0xf]
        %v282 = vld [vmem:[%s235 + $0xb8] sm:$0xf]
        %v283 = vld [vmem:[%s235 + $0xbc] sm:$0x1]
        %v284 = vld [vmem:[%s235 + $0xc0] sm:$0xf]
        %v285 = vld [vmem:[%s235 + $0xc4] sm:$0xf]
        %v286 = vld [vmem:[%s235 + $0xc8] sm:$0x1]
        %v319 = vunpack.c.l.b16 %v236
        %v320 = vunpack.c.l.b16 %v237
        %v321 = vunpack.c.l.b16 %v239
        %v322 = vunpack.c.l.b16 %v240
        %v323 = vunpack.c.l.b16 %v242
        %v324 = vunpack.c.l.b16 %v243
        %v325 = vunpack.c.l.b16 %v245
        %v326 = vunpack.c.l.b16 %v246
        %v327 = vunpack.c.l.b16 %v248
        %v328 = vunpack.c.l.b16 %v249
        %v329 = vunpack.c.l.b16 %v251
        %v330 = vunpack.c.l.b16 %v252
        %v331 = vunpack.c.l.b16 %v254
        %v332 = vunpack.c.l.b16 %v255
        %v333 = vunpack.c.l.b16 %v257
        %v334 = vunpack.c.l.b16 %v258
        %v335 = vunpack.c.l.b16 %v260
        %v336 = vunpack.c.l.b16 %v261
        %v337 = vunpack.c.l.b16 %v263
        %v338 = vunpack.c.l.b16 %v264
        %v339 = vunpack.c.l.b16 %v266
        %v340 = vunpack.c.l.b16 %v267
        %v341 = vunpack.c.l.b16 %v269
        %v342 = vunpack.c.l.b16 %v270
        %v343 = vunpack.c.l.b16 %v272
        %v344 = vunpack.c.l.b16 %v273
        %v345 = vunpack.c.l.b16 %v275
        %v346 = vunpack.c.l.b16 %v276
        %v347 = vunpack.c.l.b16 %v278
        %v348 = vunpack.c.l.b16 %v279
        %v349 = vunpack.c.l.b16 %v281
        %v350 = vunpack.c.l.b16 %v282
        %v351 = vpack.c.b16 %v320, %v319
        %v352 = vpack.c.b16 %v322, %v321
        %v353 = vpack.c.b16 %v324, %v323
        %v354 = vpack.c.b16 %v326, %v325
        %v355 = vpack.c.b16 %v328, %v327
        %v356 = vpack.c.b16 %v330, %v329
        %v357 = vpack.c.b16 %v332, %v331
        %v358 = vpack.c.b16 %v334, %v333
        %v359 = vpack.c.b16 %v336, %v335
        %v360 = vpack.c.b16 %v338, %v337
        %v361 = vpack.c.b16 %v340, %v339
        %v362 = vpack.c.b16 %v342, %v341
        %v363 = vpack.c.b16 %v344, %v343
        %v364 = vpack.c.b16 %v346, %v345
        %v365 = vpack.c.b16 %v348, %v347
        %v366 = vpack.c.b16 %v350, %v349
        %v399 = vunpack.c.l.b16 %v238
        %v400 = vunpack.c.l.b16 %v241
        %v401 = vunpack.c.l.b16 %v244
        %v402 = vunpack.c.l.b16 %v247
        %v403 = vunpack.c.l.b16 %v250
        %v404 = vunpack.c.l.b16 %v253
        %v405 = vunpack.c.l.b16 %v256
        %v406 = vunpack.c.l.b16 %v259
        %v407 = vunpack.c.l.b16 %v262
        %v408 = vunpack.c.l.b16 %v265
        %v409 = vunpack.c.l.b16 %v268
        %v410 = vunpack.c.l.b16 %v271
        %v411 = vunpack.c.l.b16 %v274
        %v412 = vunpack.c.l.b16 %v277
        %v413 = vunpack.c.l.b16 %v280
        %v414 = vunpack.c.l.b16 %v283
        %v415 = vpack.c.b16 %v399, %v399
        %v416 = vpack.c.b16 %v400, %v400
        %v417 = vpack.c.b16 %v401, %v401
        %v418 = vpack.c.b16 %v402, %v402
        %v419 = vpack.c.b16 %v403, %v403
        %v420 = vpack.c.b16 %v404, %v404
        %v421 = vpack.c.b16 %v405, %v405
        %v422 = vpack.c.b16 %v406, %v406
        %v423 = vpack.c.b16 %v407, %v407
        %v424 = vpack.c.b16 %v408, %v408
        %v425 = vpack.c.b16 %v409, %v409
        %v426 = vpack.c.b16 %v410, %v410
        %v427 = vpack.c.b16 %v411, %v411
        %v428 = vpack.c.b16 %v412, %v412
        %v429 = vpack.c.b16 %v413, %v413
        %v430 = vpack.c.b16 %v414, %v414
        %vm431 = vsmask.f32 7424
        %v433 = vshrl.u32 %v351, 16
        %v435 = vshll.u32 %v351, 16
        %v437 = vrot.slane %v435, 1
        %v438 = vor.u32 %v433, %v437
        %v440 = vshll.u32 %v415, 16
        %v442 = vrot.slane %v440, 1
        %v443 = vsel %vm431, %v438, %v442
        %v445 = vshrl.u32 %v352, 16
        %v447 = vshll.u32 %v352, 16
        %v449 = vrot.slane %v447, 1
        %v450 = vor.u32 %v445, %v449
        %v452 = vshll.u32 %v416, 16
        %v454 = vrot.slane %v452, 1
        %v455 = vsel %vm431, %v450, %v454
        %v457 = vshrl.u32 %v353, 16
        %v459 = vshll.u32 %v353, 16
        %v461 = vrot.slane %v459, 1
        %v462 = vor.u32 %v457, %v461
        %v464 = vshll.u32 %v417, 16
        %v466 = vrot.slane %v464, 1
        %v467 = vsel %vm431, %v462, %v466
        %v469 = vshrl.u32 %v354, 16
        %v471 = vshll.u32 %v354, 16
        %v473 = vrot.slane %v471, 1
        %v474 = vor.u32 %v469, %v473
        %v476 = vshll.u32 %v418, 16
        %v478 = vrot.slane %v476, 1
        %v479 = vsel %vm431, %v474, %v478
        %v481 = vshrl.u32 %v355, 16
        %v483 = vshll.u32 %v355, 16
        %v485 = vrot.slane %v483, 1
        %v486 = vor.u32 %v481, %v485
        %v488 = vshll.u32 %v419, 16
        %v490 = vrot.slane %v488, 1
        %v491 = vsel %vm431, %v486, %v490
        %v493 = vshrl.u32 %v356, 16
        %v495 = vshll.u32 %v356, 16
        %v497 = vrot.slane %v495, 1
        %v498 = vor.u32 %v493, %v497
        %v500 = vshll.u32 %v420, 16
        %v502 = vrot.slane %v500, 1
        %v503 = vsel %vm431, %v498, %v502
        %v505 = vshrl.u32 %v357, 16
        %v507 = vshll.u32 %v357, 16
        %v509 = vrot.slane %v507, 1
        %v510 = vor.u32 %v505, %v509
        %v512 = vshll.u32 %v421, 16
        %v514 = vrot.slane %v512, 1
        %v515 = vsel %vm431, %v510, %v514
        %v517 = vshrl.u32 %v358, 16
        %v519 = vshll.u32 %v358, 16
        %v521 = vrot.slane %v519, 1
        %v522 = vor.u32 %v517, %v521
        %v524 = vshll.u32 %v422, 16
        %v526 = vrot.slane %v524, 1
        %v527 = vsel %vm431, %v522, %v526
        %v529 = vshrl.u32 %v359, 16
        %v531 = vshll.u32 %v359, 16
        %v533 = vrot.slane %v531, 1
        %v534 = vor.u32 %v529, %v533
        %v536 = vshll.u32 %v423, 16
        %v538 = vrot.slane %v536, 1
        %v539 = vsel %vm431, %v534, %v538
        %v541 = vshrl.u32 %v360, 16
        %v543 = vshll.u32 %v360, 16
        %v545 = vrot.slane %v543, 1
        %v546 = vor.u32 %v541, %v545
        %v548 = vshll.u32 %v424, 16
        %v550 = vrot.slane %v548, 1
        %v551 = vsel %vm431, %v546, %v550
        %v553 = vshrl.u32 %v361, 16
        %v555 = vshll.u32 %v361, 16
        %v557 = vrot.slane %v555, 1
        %v558 = vor.u32 %v553, %v557
        %v560 = vshll.u32 %v425, 16
        %v562 = vrot.slane %v560, 1
        %v563 = vsel %vm431, %v558, %v562
        %v565 = vshrl.u32 %v362, 16
        %v567 = vshll.u32 %v362, 16
        %v569 = vrot.slane %v567, 1
        %v570 = vor.u32 %v565, %v569
        %v572 = vshll.u32 %v426, 16
        %v574 = vrot.slane %v572, 1
        %v575 = vsel %vm431, %v570, %v574
        %v577 = vshrl.u32 %v363, 16
        %v579 = vshll.u32 %v363, 16
        %v581 = vrot.slane %v579, 1
        %v582 = vor.u32 %v577, %v581
        %v584 = vshll.u32 %v427, 16
        %v586 = vrot.slane %v584, 1
        %v587 = vsel %vm431, %v582, %v586
        %v589 = vshrl.u32 %v364, 16
        %v591 = vshll.u32 %v364, 16
        %v593 = vrot.slane %v591, 1
        %v594 = vor.u32 %v589, %v593
        %v596 = vshll.u32 %v428, 16
        %v598 = vrot.slane %v596, 1
        %v599 = vsel %vm431, %v594, %v598
        %v601 = vshrl.u32 %v365, 16
        %v603 = vshll.u32 %v365, 16
        %v605 = vrot.slane %v603, 1
        %v606 = vor.u32 %v601, %v605
        %v608 = vshll.u32 %v429, 16
        %v610 = vrot.slane %v608, 1
        %v611 = vsel %vm431, %v606, %v610
        %v613 = vshrl.u32 %v366, 16
        %v615 = vshll.u32 %v366, 16
        %v617 = vrot.slane %v615, 1
        %v618 = vor.u32 %v613, %v617
        %v620 = vshll.u32 %v430, 16
        %v622 = vrot.slane %v620, 1
        %v623 = vsel %vm431, %v618, %v622
        %v640 = vld [vmem:[#allocation5] sm:$0xf]
        %v641 = vld [vmem:[#allocation5 + $0x4] sm:$0xf]
        %v642 = vld [vmem:[#allocation5 + $0x8] sm:$0xf]
        %v643 = vld [vmem:[#allocation5 + $0xc] sm:$0xf]
        %v644 = vld [vmem:[#allocation5 + $0x10] sm:$0xf]
        %v645 = vld [vmem:[#allocation5 + $0x14] sm:$0xf]
        %v646 = vld [vmem:[#allocation5 + $0x18] sm:$0xf]
        %v647 = vld [vmem:[#allocation5 + $0x1c] sm:$0xf]
        %v648 = vld [vmem:[#allocation5 + $0x20] sm:$0xf]
        %v649 = vld [vmem:[#allocation5 + $0x24] sm:$0xf]
        %v650 = vld [vmem:[#allocation5 + $0x28] sm:$0xf]
        %v651 = vld [vmem:[#allocation5 + $0x2c] sm:$0xf]
        %v652 = vld [vmem:[#allocation5 + $0x30] sm:$0xf]
        %v653 = vld [vmem:[#allocation5 + $0x34] sm:$0xf]
        %v654 = vld [vmem:[#allocation5 + $0x38] sm:$0xf]
        %v655 = vld [vmem:[#allocation5 + $0x3c] sm:$0xf]
        %v656 = vld [vmem:[#allocation5 + $0x40] sm:$0xf]
        %v657 = vld [vmem:[#allocation5 + $0x44] sm:$0xf]
        %v658 = vld [vmem:[#allocation5 + $0x48] sm:$0xf]
        %v659 = vld [vmem:[#allocation5 + $0x4c] sm:$0xf]
        %v660 = vld [vmem:[#allocation5 + $0x50] sm:$0xf]
        %v661 = vld [vmem:[#allocation5 + $0x54] sm:$0xf]
        %v662 = vld [vmem:[#allocation5 + $0x58] sm:$0xf]
        %v663 = vld [vmem:[#allocation5 + $0x5c] sm:$0xf]
        %v664 = vld [vmem:[#allocation5 + $0x60] sm:$0xf]
        %v665 = vld [vmem:[#allocation5 + $0x64] sm:$0xf]
        %v666 = vld [vmem:[#allocation5 + $0x68] sm:$0xf]
        %v667 = vld [vmem:[#allocation5 + $0x6c] sm:$0xf]
        %v668 = vld [vmem:[#allocation5 + $0x70] sm:$0xf]
        %v669 = vld [vmem:[#allocation5 + $0x74] sm:$0xf]
        %v670 = vld [vmem:[#allocation5 + $0x78] sm:$0xf]
        %v671 = vld [vmem:[#allocation5 + $0x7c] sm:$0xf]
        %v674 = vunpack.c.l.b16 %v284
        %v675 = vunpack.c.l.b16 %v285
        %v676 = vpack.c.b16 %v675, %v674
        %v679 = vunpack.c.l.b16 %v286
        %v680 = vpack.c.b16 %v679, %v679
        %v682 = vshrl.u32 %v676, 16
        %v684 = vshll.u32 %v676, 16
        %v686 = vrot.slane %v684, 1
        %v687 = vor.u32 %v682, %v686
        %v689 = vshll.u32 %v680, 16
        %v691 = vrot.slane %v689, 1
        %v692 = vsel %vm431, %v687, %v691
        %s694 = scalar_lea.vmem [#allocation5], 128
        %v695 = vld [vmem:[%s694] sm:$0xf]
        %v696 = vld [vmem:[%s694 + $0x4] sm:$0xf]
        %v697 = vld [vmem:[%s694 + $0x8] sm:$0xf]
        %v698 = vld [vmem:[%s694 + $0xc] sm:$0xf]
        %v699 = vld [vmem:[%s694 + $0x10] sm:$0xf]
        %v700 = vld [vmem:[%s694 + $0x14] sm:$0xf]
        %v701 = vld [vmem:[%s694 + $0x18] sm:$0xf]
        %v702 = vld [vmem:[%s694 + $0x1c] sm:$0xf]
        %v703 = vld [vmem:[%s694 + $0x20] sm:$0xf]
        %v704 = vld [vmem:[%s694 + $0x24] sm:$0xf]
        %v705 = vld [vmem:[%s694 + $0x28] sm:$0xf]
        %v706 = vld [vmem:[%s694 + $0x2c] sm:$0xf]
        %v707 = vld [vmem:[%s694 + $0x30] sm:$0xf]
        %v708 = vld [vmem:[%s694 + $0x34] sm:$0xf]
        %v709 = vld [vmem:[%s694 + $0x38] sm:$0xf]
        %v710 = vld [vmem:[%s694 + $0x3c] sm:$0xf]
        %v711 = vld [vmem:[%s694 + $0x40] sm:$0xf]
        %v712 = vld [vmem:[%s694 + $0x44] sm:$0xf]
        %v713 = vld [vmem:[%s694 + $0x48] sm:$0xf]
        %v714 = vld [vmem:[%s694 + $0x4c] sm:$0xf]
        %v715 = vld [vmem:[%s694 + $0x50] sm:$0xf]
        %v716 = vld [vmem:[%s694 + $0x54] sm:$0xf]
        %v717 = vld [vmem:[%s694 + $0x58] sm:$0xf]
        %v718 = vld [vmem:[%s694 + $0x5c] sm:$0xf]
        %v719 = vld [vmem:[%s694 + $0x60] sm:$0xf]
        %v720 = vld [vmem:[%s694 + $0x64] sm:$0xf]
        %v721 = vld [vmem:[%s694 + $0x68] sm:$0xf]
        %v722 = vld [vmem:[%s694 + $0x6c] sm:$0xf]
        %v723 = vld [vmem:[%s694 + $0x70] sm:$0xf]
        %v724 = vld [vmem:[%s694 + $0x74] sm:$0xf]
        %v725 = vld [vmem:[%s694 + $0x78] sm:$0xf]
        %v726 = vld [vmem:[%s694 + $0x7c] sm:$0xf]
        %v759 = vunpack.c.l.b16 %v695
        %v760 = vunpack.c.l.b16 %v696
        %v761 = vunpack.c.l.b16 %v697
        %v762 = vunpack.c.l.b16 %v698
        %v763 = vunpack.c.l.b16 %v699
        %v764 = vunpack.c.l.b16 %v700
        %v765 = vunpack.c.l.b16 %v701
        %v766 = vunpack.c.l.b16 %v702
        %v767 = vunpack.c.l.b16 %v703
        %v768 = vunpack.c.l.b16 %v704
        %v769 = vunpack.c.l.b16 %v705
        %v770 = vunpack.c.l.b16 %v706
        %v771 = vunpack.c.l.b16 %v707
        %v772 = vunpack.c.l.b16 %v708
        %v773 = vunpack.c.l.b16 %v709
        %v774 = vunpack.c.l.b16 %v710
        %v775 = vunpack.c.l.b16 %v711
        %v776 = vunpack.c.l.b16 %v712
        %v777 = vunpack.c.l.b16 %v713
        %v778 = vunpack.c.l.b16 %v714
        %v779 = vunpack.c.l.b16 %v715
        %v780 = vunpack.c.l.b16 %v716
        %v781 = vunpack.c.l.b16 %v717
        %v782 = vunpack.c.l.b16 %v718
        %v783 = vunpack.c.l.b16 %v719
        %v784 = vunpack.c.l.b16 %v720
        %v785 = vunpack.c.l.b16 %v721
        %v786 = vunpack.c.l.b16 %v722
        %v787 = vunpack.c.l.b16 %v723
        %v788 = vunpack.c.l.b16 %v724
        %v789 = vunpack.c.l.b16 %v725
        %v790 = vunpack.c.l.b16 %v726
        %v791 = vpack.c.b16 %v760, %v759
        %v792 = vpack.c.b16 %v762, %v761
        %v793 = vpack.c.b16 %v764, %v763
        %v794 = vpack.c.b16 %v766, %v765
        %v795 = vpack.c.b16 %v768, %v767
        %v796 = vpack.c.b16 %v770, %v769
        %v797 = vpack.c.b16 %v772, %v771
        %v798 = vpack.c.b16 %v774, %v773
        %v799 = vpack.c.b16 %v776, %v775
        %v800 = vpack.c.b16 %v778, %v777
        %v801 = vpack.c.b16 %v780, %v779
        %v802 = vpack.c.b16 %v782, %v781
        %v803 = vpack.c.b16 %v784, %v783
        %v804 = vpack.c.b16 %v786, %v785
        %v805 = vpack.c.b16 %v788, %v787
        %v806 = vpack.c.b16 %v790, %v789
        %823 = vmatprep.subr.bf16.mxu0 0
        %824 = vmatpush1.bf16.msra.mxu0 %v791
        %825 = vmatprep.subr.bf16.mxu0 0
        %826 = vmatpush1.bf16.msra.mxu0 %v792
        %827 = vmatprep.subr.bf16.mxu0 0
        %828 = vmatpush1.bf16.msra.mxu0 %v793
        %829 = vmatprep.subr.bf16.mxu0 0
        %830 = vmatpush1.bf16.msra.mxu0 %v794
        %831 = vmatprep.subr.bf16.mxu0 0
        %832 = vmatpush1.bf16.msra.mxu0 %v795
        %833 = vmatprep.subr.bf16.mxu0 0
        %834 = vmatpush1.bf16.msra.mxu0 %v796
        %835 = vmatprep.subr.bf16.mxu0 0
        %836 = vmatpush1.bf16.msra.mxu0 %v797
        %837 = vmatprep.subr.bf16.mxu0 0
        %838 = vmatpush1.bf16.msra.mxu0 %v798
        %839 = vmatprep.subr.bf16.mxu0 0
        %840 = vmatpush1.bf16.msra.mxu0 %v799
        %841 = vmatprep.subr.bf16.mxu0 0
        %842 = vmatpush1.bf16.msra.mxu0 %v800
        %843 = vmatprep.subr.bf16.mxu0 0
        %844 = vmatpush1.bf16.msra.mxu0 %v801
        %845 = vmatprep.subr.bf16.mxu0 0
        %846 = vmatpush1.bf16.msra.mxu0 %v802
        %847 = vmatprep.subr.bf16.mxu0 0
        %848 = vmatpush1.bf16.msra.mxu0 %v803
        %849 = vmatprep.subr.bf16.mxu0 0
        %850 = vmatpush1.bf16.msra.mxu0 %v804
        %851 = vmatprep.subr.bf16.mxu0 0
        %852 = vmatpush1.bf16.msra.mxu0 %v805
        %853 = vmatprep.subr.bf16.mxu0 0
        %854 = vmatpush1.bf16.msra.mxu0 %v806
        %855 = vmatprep.mubr.bf16.mxu0 %v455
        %856 = vmatmul.mubr.bf16.gmra.mrb[0].mxu0 %v352
        %v857 = vpop.f32.mrb[0].mxu0
        %v858 = vadd.f32 0.0, %v857
        %v859 = vpop.f32.mrb[0].mxu0
        %v860 = vpop.f32.mrb[0].mxu0
        %v861 = vadd.f32 0.0, %v860
        %v862 = vpop.f32.mrb[0].mxu0
        %863 = vmatprep.mubr.bf16.mxu0 %v467
        %864 = vmatmul.mubr.bf16.gmra.mrb[0].mxu0 %v353
        %v865 = vpop.f32.mrb[0].mxu0
        %v866 = vadd.f32 0.0, %v865
        %v867 = vpop.f32.mrb[0].mxu0
        %v868 = vpop.f32.mrb[0].mxu0
        %v869 = vadd.f32 0.0, %v868
        %v870 = vpop.f32.mrb[0].mxu0
        %871 = vmatprep.mubr.bf16.mxu0 %v479
        %872 = vmatmul.mubr.bf16.gmra.mrb[0].mxu0 %v354
        %v873 = vpop.f32.mrb[0].mxu0
        %v874 = vadd.f32 0.0, %v873
        %v875 = vpop.f32.mrb[0].mxu0
        %v876 = vpop.f32.mrb[0].mxu0
        %v877 = vadd.f32 0.0, %v876
        %v878 = vpop.f32.mrb[0].mxu0
        %879 = vmatprep.mubr.bf16.mxu0 %v491
        %880 = vmatmul.mubr.bf16.gmra.mrb[0].mxu0 %v355
        %v881 = vpop.f32.mrb[0].mxu0
        %v882 = vadd.f32 0.0, %v881
        %v883 = vpop.f32.mrb[0].mxu0
        %v884 = vpop.f32.mrb[0].mxu0
        %v885 = vadd.f32 0.0, %v884
        %v886 = vpop.f32.mrb[0].mxu0
        %887 = vmatprep.mubr.bf16.mxu0 %v503
        %888 = vmatmul.mubr.bf16.gmra.mrb[0].mxu0 %v356
        %v889 = vpop.f32.mrb[0].mxu0
        %v890 = vadd.f32 0.0, %v889
        %v891 = vpop.f32.mrb[0].mxu0
        %v892 = vpop.f32.mrb[0].mxu0
        %v893 = vadd.f32 0.0, %v892
        %v894 = vpop.f32.mrb[0].mxu0
        %895 = vmatprep.mubr.bf16.mxu0 %v515
        %896 = vmatmul.mubr.bf16.gmra.mrb[0].mxu0 %v357
        %v897 = vpop.f32.mrb[0].mxu0
        %v898 = vadd.f32 0.0, %v897
        %v899 = vpop.f32.mrb[0].mxu0
        %v900 = vpop.f32.mrb[0].mxu0
        %v901 = vadd.f32 0.0, %v900
        %v902 = vpop.f32.mrb[0].mxu0
        %903 = vmatprep.mubr.bf16.mxu0 %v527
        %904 = vmatmul.mubr.bf16.gmra.mrb[0].mxu0 %v358
        %v905 = vpop.f32.mrb[0].mxu0
        %v906 = vadd.f32 0.0, %v905
        %v907 = vpop.f32.mrb[0].mxu0
        %v908 = vpop.f32.mrb[0].mxu0
        %v909 = vadd.f32 0.0, %v908
        %v910 = vpop.f32.mrb[0].mxu0
        %911 = vmatprep.mubr.bf16.mxu0 %v539
        %912 = vmatmul.mubr.bf16.gmra.mrb[0].mxu0 %v359
        %v913 = vpop.f32.mrb[0].mxu0
        %v914 = vadd.f32 0.0, %v913
        %v915 = vpop.f32.mrb[0].mxu0
        %v916 = vpop.f32.mrb[0].mxu0
        %v917 = vadd.f32 0.0, %v916
        %v918 = vpop.f32.mrb[0].mxu0
        %919 = vmatprep.mubr.bf16.mxu0 %v551
        %920 = vmatmul.mubr.bf16.gmra.mrb[0].mxu0 %v360
        %v921 = vpop.f32.mrb[0].mxu0
        %v922 = vadd.f32 0.0, %v921
        %v923 = vpop.f32.mrb[0].mxu0
        %v924 = vpop.f32.mrb[0].mxu0
        %v925 = vadd.f32 0.0, %v924
        %v926 = vpop.f32.mrb[0].mxu0
        %927 = vmatprep.mubr.bf16.mxu0 %v563
        %928 = vmatmul.mubr.bf16.gmra.mrb[0].mxu0 %v361
        %v929 = vpop.f32.mrb[0].mxu0
        %v930 = vadd.f32 0.0, %v929
        %v931 = vpop.f32.mrb[0].mxu0
        %v932 = vpop.f32.mrb[0].mxu0
        %v933 = vadd.f32 0.0, %v932
        %v934 = vpop.f32.mrb[0].mxu0
        %935 = vmatprep.mubr.bf16.mxu0 %v575
        %936 = vmatmul.mubr.bf16.gmra.mrb[0].mxu0 %v362
        %v937 = vpop.f32.mrb[0].mxu0
        %v938 = vadd.f32 0.0, %v937
        %v939 = vpop.f32.mrb[0].mxu0
        %v940 = vpop.f32.mrb[0].mxu0
        %v941 = vadd.f32 0.0, %v940
        %v942 = vpop.f32.mrb[0].mxu0
        %943 = vmatprep.mubr.bf16.mxu0 %v587
        %944 = vmatmul.mubr.bf16.gmra.mrb[0].mxu0 %v363
        %v945 = vpop.f32.mrb[0].mxu0
        %v946 = vadd.f32 0.0, %v945
        %v947 = vpop.f32.mrb[0].mxu0
        %v948 = vpop.f32.mrb[0].mxu0
        %v949 = vadd.f32 0.0, %v948
        %v950 = vpop.f32.mrb[0].mxu0
        %951 = vmatprep.mubr.bf16.mxu0 %v599
        %952 = vmatmul.mubr.bf16.gmra.mrb[0].mxu0 %v364
        %v953 = vpop.f32.mrb[0].mxu0
        %v954 = vadd.f32 0.0, %v953
        %v955 = vpop.f32.mrb[0].mxu0
        %v956 = vpop.f32.mrb[0].mxu0
        %v957 = vadd.f32 0.0, %v956
        %v958 = vpop.f32.mrb[0].mxu0
        %959 = vmatprep.mubr.bf16.mxu0 %v611
        %960 = vmatmul.mubr.bf16.gmra.mrb[0].mxu0 %v365
        %v961 = vpop.f32.mrb[0].mxu0
        %v962 = vadd.f32 0.0, %v961
        %v963 = vpop.f32.mrb[0].mxu0
        %v964 = vpop.f32.mrb[0].mxu0
        %v965 = vadd.f32 0.0, %v964
        %v966 = vpop.f32.mrb[0].mxu0
        %967 = vmatprep.mubr.bf16.mxu0 %v623
        %968 = vmatmul.mubr.bf16.gmra.mrb[0].mxu0 %v366
        %v969 = vpop.f32.mrb[0].mxu0
        %v970 = vadd.f32 0.0, %v969
        %v971 = vpop.f32.mrb[0].mxu0
        %v972 = vpop.f32.mrb[0].mxu0
        %v973 = vadd.f32 0.0, %v972
        %v974 = vpop.f32.mrb[0].mxu0
        %975 = vmatprep.mubr.bf16.mxu0 %v692
        %976 = vmatmul.mubr.bf16.gmra.mrb[0].mxu0 %v676
        %v977 = vpop.f32.mrb[0].mxu0
        %v978 = vadd.f32 0.0, %v977
        %v979 = vpop.f32.mrb[0].mxu0
        %v980 = vpop.f32.mrb[0].mxu0
        %v981 = vadd.f32 0.0, %v980
        %v982 = vpop.f32.mrb[0].mxu0
        %983 = vdwg.mxu0
        %v1016 = vunpack.c.l.b16 %v640
        %v1017 = vunpack.c.l.b16 %v641
        %v1018 = vunpack.c.l.b16 %v642
        %v1019 = vunpack.c.l.b16 %v643
        %v1020 = vunpack.c.l.b16 %v644
        %v1021 = vunpack.c.l.b16 %v645
        %v1022 = vunpack.c.l.b16 %v646
        %v1023 = vunpack.c.l.b16 %v647
        %v1024 = vunpack.c.l.b16 %v648
        %v1025 = vunpack.c.l.b16 %v649
        %v1026 = vunpack.c.l.b16 %v650
        %v1027 = vunpack.c.l.b16 %v651
        %v1028 = vunpack.c.l.b16 %v652
        %v1029 = vunpack.c.l.b16 %v653
        %v1030 = vunpack.c.l.b16 %v654
        %v1031 = vunpack.c.l.b16 %v655
        %v1032 = vunpack.c.l.b16 %v656
        %v1033 = vunpack.c.l.b16 %v657
        %v1034 = vunpack.c.l.b16 %v658
        %v1035 = vunpack.c.l.b16 %v659
        %v1036 = vunpack.c.l.b16 %v660
        %v1037 = vunpack.c.l.b16 %v661
        %v1038 = vunpack.c.l.b16 %v662
        %v1039 = vunpack.c.l.b16 %v663
        %v1040 = vunpack.c.l.b16 %v664
        %v1041 = vunpack.c.l.b16 %v665
        %v1042 = vunpack.c.l.b16 %v666
        %v1043 = vunpack.c.l.b16 %v667
        %v1044 = vunpack.c.l.b16 %v668
        %v1045 = vunpack.c.l.b16 %v669
        %v1046 = vunpack.c.l.b16 %v670
        %v1047 = vunpack.c.l.b16 %v671
        %v1048 = vpack.c.b16 %v1017, %v1016
        %v1049 = vpack.c.b16 %v1019, %v1018
        %v1050 = vpack.c.b16 %v1021, %v1020
        %v1051 = vpack.c.b16 %v1023, %v1022
        %v1052 = vpack.c.b16 %v1025, %v1024
        %v1053 = vpack.c.b16 %v1027, %v1026
        %v1054 = vpack.c.b16 %v1029, %v1028
        %v1055 = vpack.c.b16 %v1031, %v1030
        %v1056 = vpack.c.b16 %v1033, %v1032
        %v1057 = vpack.c.b16 %v1035, %v1034
        %v1058 = vpack.c.b16 %v1037, %v1036
        %v1059 = vpack.c.b16 %v1039, %v1038
        %v1060 = vpack.c.b16 %v1041, %v1040
        %v1061 = vpack.c.b16 %v1043, %v1042
        %v1062 = vpack.c.b16 %v1045, %v1044
        %v1063 = vpack.c.b16 %v1047, %v1046
        %1080 = vmatprep.subr.bf16.mxu0 0
        %1081 = vmatpush1.bf16.msra.mxu0 %v1048
        %1082 = vmatprep.subr.bf16.mxu0 0
        %1083 = vmatpush1.bf16.msra.mxu0 %v1049
        %1084 = vmatprep.subr.bf16.mxu0 0
        %1085 = vmatpush1.bf16.msra.mxu0 %v1050
        %1086 = vmatprep.subr.bf16.mxu0 0
        %1087 = vmatpush1.bf16.msra.mxu0 %v1051
        %1088 = vmatprep.subr.bf16.mxu0 0
        %1089 = vmatpush1.bf16.msra.mxu0 %v1052
        %1090 = vmatprep.subr.bf16.mxu0 0
        %1091 = vmatpush1.bf16.msra.mxu0 %v1053
        %1092 = vmatprep.subr.bf16.mxu0 0
        %1093 = vmatpush1.bf16.msra.mxu0 %v1054
        %1094 = vmatprep.subr.bf16.mxu0 0
        %1095 = vmatpush1.bf16.msra.mxu0 %v1055
        %1096 = vmatprep.subr.bf16.mxu0 0
        %1097 = vmatpush1.bf16.msra.mxu0 %v1056
        %1098 = vmatprep.subr.bf16.mxu0 0
        %1099 = vmatpush1.bf16.msra.mxu0 %v1057
        %1100 = vmatprep.subr.bf16.mxu0 0
        %1101 = vmatpush1.bf16.msra.mxu0 %v1058
        %1102 = vmatprep.subr.bf16.mxu0 0
        %1103 = vmatpush1.bf16.msra.mxu0 %v1059
        %1104 = vmatprep.subr.bf16.mxu0 0
        %1105 = vmatpush1.bf16.msra.mxu0 %v1060
        %1106 = vmatprep.subr.bf16.mxu0 0
        %1107 = vmatpush1.bf16.msra.mxu0 %v1061
        %1108 = vmatprep.subr.bf16.mxu0 0
        %1109 = vmatpush1.bf16.msra.mxu0 %v1062
        %1110 = vmatprep.subr.bf16.mxu0 0
        %1111 = vmatpush1.bf16.msra.mxu0 %v1063
        %1112 = vmatprep.mubr.bf16.mxu0 %v443
        %1113 = vmatmul.mubr.bf16.gmra.mrb[0].mxu0 %v351
        %v1114 = vpop.f32.mrb[0].mxu0
        %v1115 = vadd.f32 %v858, %v1114
        %v1116 = vpop.f32.mrb[0].mxu0
        %v1117 = vpop.f32.mrb[0].mxu0
        %v1118 = vadd.f32 %v861, %v1117
        %v1119 = vpop.f32.mrb[0].mxu0
        %1120 = vmatprep.mubr.bf16.mxu0 %v455
        %1121 = vmatmul.mubr.bf16.gmra.mrb[0].mxu0 %v352
        %v1122 = vpop.f32.mrb[0].mxu0
        %v1123 = vadd.f32 %v866, %v1122
        %v1124 = vpop.f32.mrb[0].mxu0
        %v1125 = vpop.f32.mrb[0].mxu0
        %v1126 = vadd.f32 %v869, %v1125
        %v1127 = vpop.f32.mrb[0].mxu0
        %1128 = vmatprep.mubr.bf16.mxu0 %v467
        %1129 = vmatmul.mubr.bf16.gmra.mrb[0].mxu0 %v353
        %v1130 = vpop.f32.mrb[0].mxu0
        %v1131 = vadd.f32 %v874, %v1130
        %v1132 = vpop.f32.mrb[0].mxu0
        %v1133 = vpop.f32.mrb[0].mxu0
        %v1134 = vadd.f32 %v877, %v1133
        %v1135 = vpop.f32.mrb[0].mxu0
        %1136 = vmatprep.mubr.bf16.mxu0 %v479
        %1137 = vmatmul.mubr.bf16.gmra.mrb[0].mxu0 %v354
        %v1138 = vpop.f32.mrb[0].mxu0
        %v1139 = vadd.f32 %v882, %v1138
        %v1140 = vpop.f32.mrb[0].mxu0
        %v1141 = vpop.f32.mrb[0].mxu0
        %v1142 = vadd.f32 %v885, %v1141
        %v1143 = vpop.f32.mrb[0].mxu0
        %1144 = vmatprep.mubr.bf16.mxu0 %v491
        %1145 = vmatmul.mubr.bf16.gmra.mrb[0].mxu0 %v355
        %v1146 = vpop.f32.mrb[0].mxu0
        %v1147 = vadd.f32 %v890, %v1146
        %v1148 = vpop.f32.mrb[0].mxu0
        %v1149 = vpop.f32.mrb[0].mxu0
        %v1150 = vadd.f32 %v893, %v1149
        %v1151 = vpop.f32.mrb[0].mxu0
        %1152 = vmatprep.mubr.bf16.mxu0 %v503
        %1153 = vmatmul.mubr.bf16.gmra.mrb[0].mxu0 %v356
        %v1154 = vpop.f32.mrb[0].mxu0
        %v1155 = vadd.f32 %v898, %v1154
        %v1156 = vpop.f32.mrb[0].mxu0
        %v1157 = vpop.f32.mrb[0].mxu0
        %v1158 = vadd.f32 %v901, %v1157
        %v1159 = vpop.f32.mrb[0].mxu0
        %1160 = vmatprep.mubr.bf16.mxu0 %v515
        %1161 = vmatmul.mubr.bf16.gmra.mrb[0].mxu0 %v357
        %v1162 = vpop.f32.mrb[0].mxu0
        %v1163 = vadd.f32 %v906, %v1162
        %v1164 = vpop.f32.mrb[0].mxu0
        %v1165 = vpop.f32.mrb[0].mxu0
        %v1166 = vadd.f32 %v909, %v1165
        %v1167 = vpop.f32.mrb[0].mxu0
        %1168 = vmatprep.mubr.bf16.mxu0 %v527
        %1169 = vmatmul.mubr.bf16.gmra.mrb[0].mxu0 %v358
        %v1170 = vpop.f32.mrb[0].mxu0
        %v1171 = vadd.f32 %v914, %v1170
        %v1172 = vpop.f32.mrb[0].mxu0
        %v1173 = vpop.f32.mrb[0].mxu0
        %v1174 = vadd.f32 %v917, %v1173
        %v1175 = vpop.f32.mrb[0].mxu0
        %1176 = vmatprep.mubr.bf16.mxu0 %v539
        %1177 = vmatmul.mubr.bf16.gmra.mrb[0].mxu0 %v359
        %v1178 = vpop.f32.mrb[0].mxu0
        %v1179 = vadd.f32 %v922, %v1178
        %v1180 = vpop.f32.mrb[0].mxu0
        %v1181 = vpop.f32.mrb[0].mxu0
        %v1182 = vadd.f32 %v925, %v1181
        %v1183 = vpop.f32.mrb[0].mxu0
        %1184 = vmatprep.mubr.bf16.mxu0 %v551
        %1185 = vmatmul.mubr.bf16.gmra.mrb[0].mxu0 %v360
        %v1186 = vpop.f32.mrb[0].mxu0
        %v1187 = vadd.f32 %v930, %v1186
        %v1188 = vpop.f32.mrb[0].mxu0
        %v1189 = vpop.f32.mrb[0].mxu0
        %v1190 = vadd.f32 %v933, %v1189
        %v1191 = vpop.f32.mrb[0].mxu0
        %1192 = vmatprep.mubr.bf16.mxu0 %v563
        %1193 = vmatmul.mubr.bf16.gmra.mrb[0].mxu0 %v361
        %v1194 = vpop.f32.mrb[0].mxu0
        %v1195 = vadd.f32 %v938, %v1194
        %v1196 = vpop.f32.mrb[0].mxu0
        %v1197 = vpop.f32.mrb[0].mxu0
        %v1198 = vadd.f32 %v941, %v1197
        %v1199 = vpop.f32.mrb[0].mxu0
        %1200 = vmatprep.mubr.bf16.mxu0 %v575
        %1201 = vmatmul.mubr.bf16.gmra.mrb[0].mxu0 %v362
        %v1202 = vpop.f32.mrb[0].mxu0
        %v1203 = vadd.f32 %v946, %v1202
        %v1204 = vpop.f32.mrb[0].mxu0
        %v1205 = vpop.f32.mrb[0].mxu0
        %v1206 = vadd.f32 %v949, %v1205
        %v1207 = vpop.f32.mrb[0].mxu0
        %1208 = vmatprep.mubr.bf16.mxu0 %v587
        %1209 = vmatmul.mubr.bf16.gmra.mrb[0].mxu0 %v363
        %v1210 = vpop.f32.mrb[0].mxu0
        %v1211 = vadd.f32 %v954, %v1210
        %v1212 = vpop.f32.mrb[0].mxu0
        %v1213 = vpop.f32.mrb[0].mxu0
        %v1214 = vadd.f32 %v957, %v1213
        %v1215 = vpop.f32.mrb[0].mxu0
        %1216 = vmatprep.mubr.bf16.mxu0 %v599
        %1217 = vmatmul.mubr.bf16.gmra.mrb[0].mxu0 %v364
        %v1218 = vpop.f32.mrb[0].mxu0
        %v1219 = vadd.f32 %v962, %v1218
        %v1220 = vpop.f32.mrb[0].mxu0
        %v1221 = vpop.f32.mrb[0].mxu0
        %v1222 = vadd.f32 %v965, %v1221
        %v1223 = vpop.f32.mrb[0].mxu0
        %1224 = vmatprep.mubr.bf16.mxu0 %v611
        %1225 = vmatmul.mubr.bf16.gmra.mrb[0].mxu0 %v365
        %v1226 = vpop.f32.mrb[0].mxu0
        %v1227 = vadd.f32 %v970, %v1226
        %v1228 = vpop.f32.mrb[0].mxu0
        %v1229 = vpop.f32.mrb[0].mxu0
        %v1230 = vadd.f32 %v973, %v1229
        %v1231 = vpop.f32.mrb[0].mxu0
        %1232 = vmatprep.mubr.bf16.mxu0 %v623
        %1233 = vmatmul.mubr.bf16.gmra.mrb[0].mxu0 %v366
        %v1234 = vpop.f32.mrb[0].mxu0
        %v1235 = vadd.f32 %v978, %v1234
        %v1236 = vpop.f32.mrb[0].mxu0
        %v1237 = vpop.f32.mrb[0].mxu0
        %v1238 = vadd.f32 %v981, %v1237
        %v1239 = vpop.f32.mrb[0].mxu0
        %1240 = vdwg.mxu0
        %v1241 = vld [vmem:[#allocation7] sm:$0x1]
        %v1243 = vlaneseq
        %v1244 = vshrl.u32 %v1243, 7
        %v1245 = vsub.s32 0, %v1244
        %v1246 = vrot.slane %v1241, %v1245
        %v1248 = vadd.f32 %v1115, %v1246
        %v1249 = vadd.f32 %v1118, %v1246
        %v1250 = vadd.f32 %v1123, %v1246
        %v1251 = vadd.f32 %v1126, %v1246
        %v1252 = vadd.f32 %v1131, %v1246
        %v1253 = vadd.f32 %v1134, %v1246
        %v1254 = vadd.f32 %v1139, %v1246
        %v1255 = vadd.f32 %v1142, %v1246
        %v1256 = vadd.f32 %v1147, %v1246
        %v1257 = vadd.f32 %v1150, %v1246
        %v1258 = vadd.f32 %v1155, %v1246
        %v1259 = vadd.f32 %v1158, %v1246
        %v1260 = vadd.f32 %v1163, %v1246
        %v1261 = vadd.f32 %v1166, %v1246
        %v1262 = vadd.f32 %v1171, %v1246
        %v1263 = vadd.f32 %v1174, %v1246
        %v1264 = vadd.f32 %v1179, %v1246
        %v1265 = vadd.f32 %v1182, %v1246
        %v1266 = vadd.f32 %v1187, %v1246
        %v1267 = vadd.f32 %v1190, %v1246
        %v1268 = vadd.f32 %v1195, %v1246
        %v1269 = vadd.f32 %v1198, %v1246
        %v1270 = vadd.f32 %v1203, %v1246
        %v1271 = vadd.f32 %v1206, %v1246
        %v1272 = vadd.f32 %v1211, %v1246
        %v1273 = vadd.f32 %v1214, %v1246
        %v1274 = vadd.f32 %v1219, %v1246
        %v1275 = vadd.f32 %v1222, %v1246
        %v1276 = vadd.f32 %v1227, %v1246
        %v1277 = vadd.f32 %v1230, %v1246
        %v1278 = vadd.f32 %v1235, %v1246
        %v1279 = vadd.f32 %v1238, %v1246
        %vm1280 = vcmp.ge.f32.partialorder %v1248, 0.0
        %vm1281 = vcmp.ge.f32.partialorder %v1249, 0.0
        %vm1282 = vcmp.ge.f32.partialorder %v1250, 0.0
        %vm1283 = vcmp.ge.f32.partialorder %v1251, 0.0
        %vm1284 = vcmp.ge.f32.partialorder %v1252, 0.0
        %vm1285 = vcmp.ge.f32.partialorder %v1253, 0.0
        %vm1286 = vcmp.ge.f32.partialorder %v1254, 0.0
        %vm1287 = vcmp.ge.f32.partialorder %v1255, 0.0
        %vm1288 = vcmp.ge.f32.partialorder %v1256, 0.0
        %vm1289 = vcmp.ge.f32.partialorder %v1257, 0.0
        %vm1290 = vcmp.ge.f32.partialorder %v1258, 0.0
        %vm1291 = vcmp.ge.f32.partialorder %v1259, 0.0
        %vm1292 = vcmp.ge.f32.partialorder %v1260, 0.0
        %vm1293 = vcmp.ge.f32.partialorder %v1261, 0.0
        %vm1294 = vcmp.ge.f32.partialorder %v1262, 0.0
        %vm1295 = vcmp.ge.f32.partialorder %v1263, 0.0
        %vm1296 = vcmp.ge.f32.partialorder %v1264, 0.0
        %vm1297 = vcmp.ge.f32.partialorder %v1265, 0.0
        %vm1298 = vcmp.ge.f32.partialorder %v1266, 0.0
        %vm1299 = vcmp.ge.f32.partialorder %v1267, 0.0
        %vm1300 = vcmp.ge.f32.partialorder %v1268, 0.0
        %vm1301 = vcmp.ge.f32.partialorder %v1269, 0.0
        %vm1302 = vcmp.ge.f32.partialorder %v1270, 0.0
        %vm1303 = vcmp.ge.f32.partialorder %v1271, 0.0
        %vm1304 = vcmp.ge.f32.partialorder %v1272, 0.0
        %vm1305 = vcmp.ge.f32.partialorder %v1273, 0.0
        %vm1306 = vcmp.ge.f32.partialorder %v1274, 0.0
        %vm1307 = vcmp.ge.f32.partialorder %v1275, 0.0
        %vm1308 = vcmp.ge.f32.partialorder %v1276, 0.0
        %vm1309 = vcmp.ge.f32.partialorder %v1277, 0.0
        %vm1310 = vcmp.ge.f32.partialorder %v1278, 0.0
        %vm1311 = vcmp.ge.f32.partialorder %v1279, 0.0
        %v1312 = vmul.f32 %v1248, 0.2
        %v1313 = vmul.f32 %v1249, 0.2
        %v1314 = vmul.f32 %v1250, 0.2
        %v1315 = vmul.f32 %v1251, 0.2
        %v1316 = vmul.f32 %v1252, 0.2
        %v1317 = vmul.f32 %v1253, 0.2
        %v1318 = vmul.f32 %v1254, 0.2
        %v1319 = vmul.f32 %v1255, 0.2
        %v1320 = vmul.f32 %v1256, 0.2
        %v1321 = vmul.f32 %v1257, 0.2
        %v1322 = vmul.f32 %v1258, 0.2
        %v1323 = vmul.f32 %v1259, 0.2
        %v1324 = vmul.f32 %v1260, 0.2
        %v1325 = vmul.f32 %v1261, 0.2
        %v1326 = vmul.f32 %v1262, 0.2
        %v1327 = vmul.f32 %v1263, 0.2
        %v1328 = vmul.f32 %v1264, 0.2
        %v1329 = vmul.f32 %v1265, 0.2
        %v1330 = vmul.f32 %v1266, 0.2
        %v1331 = vmul.f32 %v1267, 0.2
        %v1332 = vmul.f32 %v1268, 0.2
        %v1333 = vmul.f32 %v1269, 0.2
        %v1334 = vmul.f32 %v1270, 0.2
        %v1335 = vmul.f32 %v1271, 0.2
        %v1336 = vmul.f32 %v1272, 0.2
        %v1337 = vmul.f32 %v1273, 0.2
        %v1338 = vmul.f32 %v1274, 0.2
        %v1339 = vmul.f32 %v1275, 0.2
        %v1340 = vmul.f32 %v1276, 0.2
        %v1341 = vmul.f32 %v1277, 0.2
        %v1342 = vmul.f32 %v1278, 0.2
        %v1343 = vmul.f32 %v1279, 0.2
        %v1344 = vsel %vm1280, %v1248, %v1312
        %v1345 = vsel %vm1281, %v1249, %v1313
        %v1346 = vsel %vm1282, %v1250, %v1314
        %v1347 = vsel %vm1283, %v1251, %v1315
        %v1348 = vsel %vm1284, %v1252, %v1316
        %v1349 = vsel %vm1285, %v1253, %v1317
        %v1350 = vsel %vm1286, %v1254, %v1318
        %v1351 = vsel %vm1287, %v1255, %v1319
        %v1352 = vsel %vm1288, %v1256, %v1320
        %v1353 = vsel %vm1289, %v1257, %v1321
        %v1354 = vsel %vm1290, %v1258, %v1322
        %v1355 = vsel %vm1291, %v1259, %v1323
        %v1356 = vsel %vm1292, %v1260, %v1324
        %v1357 = vsel %vm1293, %v1261, %v1325
        %v1358 = vsel %vm1294, %v1262, %v1326
        %v1359 = vsel %vm1295, %v1263, %v1327
        %v1360 = vsel %vm1296, %v1264, %v1328
        %v1361 = vsel %vm1297, %v1265, %v1329
        %v1362 = vsel %vm1298, %v1266, %v1330
        %v1363 = vsel %vm1299, %v1267, %v1331
        %v1364 = vsel %vm1300, %v1268, %v1332
        %v1365 = vsel %vm1301, %v1269, %v1333
        %v1366 = vsel %vm1302, %v1270, %v1334
        %v1367 = vsel %vm1303, %v1271, %v1335
        %v1368 = vsel %vm1304, %v1272, %v1336
        %v1369 = vsel %vm1305, %v1273, %v1337
        %v1370 = vsel %vm1306, %v1274, %v1338
        %v1371 = vsel %vm1307, %v1275, %v1339
        %v1372 = vsel %vm1308, %v1276, %v1340
        %v1373 = vsel %vm1309, %v1277, %v1341
        %v1374 = vsel %vm1310, %v1278, %v1342
        %v1375 = vsel %vm1311, %v1279, %v1343
        %v1376 = vpack.c.bf16 %v1345, %v1344
        %v1377 = vpack.c.bf16 %v1347, %v1346
        %v1378 = vpack.c.bf16 %v1349, %v1348
        %v1379 = vpack.c.bf16 %v1351, %v1350
        %v1380 = vpack.c.bf16 %v1353, %v1352
        %v1381 = vpack.c.bf16 %v1355, %v1354
        %v1382 = vpack.c.bf16 %v1357, %v1356
        %v1383 = vpack.c.bf16 %v1359, %v1358
        %v1384 = vpack.c.bf16 %v1361, %v1360
        %v1385 = vpack.c.bf16 %v1363, %v1362
        %v1386 = vpack.c.bf16 %v1365, %v1364
        %v1387 = vpack.c.bf16 %v1367, %v1366
        %v1388 = vpack.c.bf16 %v1369, %v1368
        %v1389 = vpack.c.bf16 %v1371, %v1370
        %v1390 = vpack.c.bf16 %v1373, %v1372
        %v1391 = vpack.c.bf16 %v1375, %v1374
        %v1408 = vunpack.c.l.b16 %v1376
        %v1409 = vunpack.c.h.b16 %v1376
        %v1410 = vunpack.c.l.b16 %v1377
        %v1411 = vunpack.c.h.b16 %v1377
        %v1412 = vunpack.c.l.b16 %v1378
        %v1413 = vunpack.c.h.b16 %v1378
        %v1414 = vunpack.c.l.b16 %v1379
        %v1415 = vunpack.c.h.b16 %v1379
        %v1416 = vunpack.c.l.b16 %v1380
        %v1417 = vunpack.c.h.b16 %v1380
        %v1418 = vunpack.c.l.b16 %v1381
        %v1419 = vunpack.c.h.b16 %v1381
        %v1420 = vunpack.c.l.b16 %v1382
        %v1421 = vunpack.c.h.b16 %v1382
        %v1422 = vunpack.c.l.b16 %v1383
        %v1423 = vunpack.c.h.b16 %v1383
        %v1424 = vunpack.c.l.b16 %v1384
        %v1425 = vunpack.c.h.b16 %v1384
        %v1426 = vunpack.c.l.b16 %v1385
        %v1427 = vunpack.c.h.b16 %v1385
        %v1428 = vunpack.c.l.b16 %v1386
        %v1429 = vunpack.c.h.b16 %v1386
        %v1430 = vunpack.c.l.b16 %v1387
        %v1431 = vunpack.c.h.b16 %v1387
        %v1432 = vunpack.c.l.b16 %v1388
        %v1433 = vunpack.c.h.b16 %v1388
        %v1434 = vunpack.c.l.b16 %v1389
        %v1435 = vunpack.c.h.b16 %v1389
        %v1436 = vunpack.c.l.b16 %v1390
        %v1437 = vunpack.c.h.b16 %v1390
        %v1438 = vunpack.c.l.b16 %v1391
        %v1439 = vunpack.c.h.b16 %v1391
        %v1440 = vpack.c.b16 %v1408, %v1408
        %v1441 = vpack.c.b16 %v1409, %v1409
        %v1442 = vpack.c.b16 %v1410, %v1410
        %v1443 = vpack.c.b16 %v1411, %v1411
        %v1444 = vpack.c.b16 %v1412, %v1412
        %v1445 = vpack.c.b16 %v1413, %v1413
        %v1446 = vpack.c.b16 %v1414, %v1414
        %v1447 = vpack.c.b16 %v1415, %v1415
        %v1448 = vpack.c.b16 %v1416, %v1416
        %v1449 = vpack.c.b16 %v1417, %v1417
        %v1450 = vpack.c.b16 %v1418, %v1418
        %v1451 = vpack.c.b16 %v1419, %v1419
        %v1452 = vpack.c.b16 %v1420, %v1420
        %v1453 = vpack.c.b16 %v1421, %v1421
        %v1454 = vpack.c.b16 %v1422, %v1422
        %v1455 = vpack.c.b16 %v1423, %v1423
        %v1456 = vpack.c.b16 %v1424, %v1424
        %v1457 = vpack.c.b16 %v1425, %v1425
        %v1458 = vpack.c.b16 %v1426, %v1426
        %v1459 = vpack.c.b16 %v1427, %v1427
        %v1460 = vpack.c.b16 %v1428, %v1428
        %v1461 = vpack.c.b16 %v1429, %v1429
        %v1462 = vpack.c.b16 %v1430, %v1430
        %v1463 = vpack.c.b16 %v1431, %v1431
        %v1464 = vpack.c.b16 %v1432, %v1432
        %v1465 = vpack.c.b16 %v1433, %v1433
        %v1466 = vpack.c.b16 %v1434, %v1434
        %v1467 = vpack.c.b16 %v1435, %v1435
        %v1468 = vpack.c.b16 %v1436, %v1436
        %v1469 = vpack.c.b16 %v1437, %v1437
        %v1470 = vpack.c.b16 %v1438, %v1438
        %v1471 = vpack.c.b16 %v1439, %v1439
        %vm1504 = vcmask 257024
        %1505 = vst.msk [vmem:[%s229] sm:$0xf] %vm1504, %v1440
        %1506 = vst.msk [vmem:[%s229 + $0x4] sm:$0xf] %vm1504, %v1441
        %1507 = vst.msk [vmem:[%s229 + $0x8] sm:$0xf] %vm1504, %v1442
        %1508 = vst.msk [vmem:[%s229 + $0xc] sm:$0xf] %vm1504, %v1443
        %1509 = vst.msk [vmem:[%s229 + $0x10] sm:$0xf] %vm1504, %v1444
        %1510 = vst.msk [vmem:[%s229 + $0x14] sm:$0xf] %vm1504, %v1445
        %1511 = vst.msk [vmem:[%s229 + $0x18] sm:$0xf] %vm1504, %v1446
        %1512 = vst.msk [vmem:[%s229 + $0x1c] sm:$0xf] %vm1504, %v1447
        %1513 = vst.msk [vmem:[%s229 + $0x20] sm:$0xf] %vm1504, %v1448
        %1514 = vst.msk [vmem:[%s229 + $0x24] sm:$0xf] %vm1504, %v1449
        %1515 = vst.msk [vmem:[%s229 + $0x28] sm:$0xf] %vm1504, %v1450
        %1516 = vst.msk [vmem:[%s229 + $0x2c] sm:$0xf] %vm1504, %v1451
        %1517 = vst.msk [vmem:[%s229 + $0x30] sm:$0xf] %vm1504, %v1452
        %1518 = vst.msk [vmem:[%s229 + $0x34] sm:$0xf] %vm1504, %v1453
        %1519 = vst.msk [vmem:[%s229 + $0x38] sm:$0xf] %vm1504, %v1454
        %1520 = vst.msk [vmem:[%s229 + $0x3c] sm:$0xf] %vm1504, %v1455
        %1521 = vst.msk [vmem:[%s229 + $0x40] sm:$0xf] %vm1504, %v1456
        %1522 = vst.msk [vmem:[%s229 + $0x44] sm:$0xf] %vm1504, %v1457
        %1523 = vst.msk [vmem:[%s229 + $0x48] sm:$0xf] %vm1504, %v1458
        %1524 = vst.msk [vmem:[%s229 + $0x4c] sm:$0xf] %vm1504, %v1459
        %1525 = vst.msk [vmem:[%s229 + $0x50] sm:$0xf] %vm1504, %v1460
        %1526 = vst.msk [vmem:[%s229 + $0x54] sm:$0xf] %vm1504, %v1461
        %1527 = vst.msk [vmem:[%s229 + $0x58] sm:$0xf] %vm1504, %v1462
        %1528 = vst.msk [vmem:[%s229 + $0x5c] sm:$0xf] %vm1504, %v1463
        %1529 = vst.msk [vmem:[%s229 + $0x60] sm:$0xf] %vm1504, %v1464
        %1530 = vst.msk [vmem:[%s229 + $0x64] sm:$0xf] %vm1504, %v1465
        %1531 = vst.msk [vmem:[%s229 + $0x68] sm:$0xf] %vm1504, %v1466
        %1532 = vst.msk [vmem:[%s229 + $0x6c] sm:$0xf] %vm1504, %v1467
        %1533 = vst.msk [vmem:[%s229 + $0x70] sm:$0xf] %vm1504, %v1468
        %1534 = vst.msk [vmem:[%s229 + $0x74] sm:$0xf] %vm1504, %v1469
        %1535 = vst.msk [vmem:[%s229 + $0x78] sm:$0xf] %vm1504, %v1470
        %1536 = vst.msk [vmem:[%s229 + $0x7c] sm:$0xf] %vm1504, %v1471
        %s1537 = sand.u32 %s111, 1
        %s1538 = scalar_lea.sflag [#allocation4], %s1537
        %s1539 = sand.u32 %s111, 1
        %s1540 = smul.addr %s1539, 128
        %s1541 = scalar_lea.vmem [#allocation8], %s1540
        // Predicated region
        $region45: #{tpu_custom_call.1} parent=31 // pred_check
          %p1542 = pneg %p121
        $region46: #{tpu_custom_call.1} parent=31 // pred_check_branch
          %1544 = sbr.rel (%p1542) target = $region48
        $region47: #{tpu_custom_call.1} parent=31 // pred_region
          %s1545 = smul.u32 16, %s26
          %s1547 = ssub.s32 2048, 2048
          %1548 = vsyncadd %s1538, %s1547
          %s1549 = smul.addr %s1545, 2
          %s1550 = smul.addr %s25, 32
          %s1551 = sadd.s32 %s1549, %s1550
          %s1552 = smul.addr %s1551, 64
          %s1553 = scalar_lea.hbm %s3, %s1552
          %s1554 = sshll.u32 %s1541, 4
          %s1555 = int_to_ptr.vmem [resolvable:$true] %s1554
          %1560 = dma.vmem_to_hbm [thread:$0]  %s1555, 2048, %s1553, %s1538, 64, 64, 4
        $region48: #{tpu_custom_call.1} parent=31 // pred_fallthru
          _
      $region32: #{tpu_custom_call.1} parent=5 // pred_fallthru
        _
      %p1561 = scmp.le.s32.totalorder 2, %s16
      // Predicated region
      $region49: #{tpu_custom_call.1} parent=5 // pred_check
        %p1562 = pneg %p1561
      $region50: #{tpu_custom_call.1} parent=5 // pred_check_branch
        %1564 = sbr.rel (%p1562) target = $region52
      $region51: #{tpu_custom_call.1} parent=5 // pred_region
        %s1565 = ssub.s32 %s16, 2
        // Predicated region
        $region53: #{tpu_custom_call.1} parent=51 // pred_check
          %p1566 = pneg %p127
        $region54: #{tpu_custom_call.1} parent=51 // pred_check_branch
          %1568 = sbr.rel (%p1566) target = $region56
        $region55: #{tpu_custom_call.1} parent=51 // pred_region
          %s1569 = sand.u32 %s112, 1
          %s1570 = scalar_lea.sflag [#allocation4], %s1569
          %s1571 = sand.u32 %s112, 1
          %s1572 = smul.addr %s1571, 128
          %s1573 = scalar_lea.vmem [#allocation8], %s1572
          %1574 = dma.done %s1570, 2048
        $region56: #{tpu_custom_call.1} parent=51 // pred_fallthru
          _
      $region52: #{tpu_custom_call.1} parent=5 // pred_fallthru
        _
    $region6: #{tpu_custom_call.1} parent=1 // loop_footer
      %s20 = sadd.s32 1, %s16
    $region7: #{tpu_custom_call.1} parent=1 // loop_footer_branch
      %15 = sbr.rel target = $region3
    $region8: #{tpu_custom_call.1} parent=1 // loop_exit
      _
    %1575 = vsyncpa [#allocation3], 1
    %s1576 = scalar_lea.sflag [#allocation3], 1
    %1577 = vsyncpa %s1576, 1
    %1578 = vsyncpa [#allocation6], 1
    %1579 = vsyncpa [#allocation4], 1
    %s1580 = scalar_lea.sflag [#allocation4], 1
    %1581 = vsyncpa %s1580, 1

</llo_original>
